<compile_context>
chip_gen: v7x
topology: tpu7x:2x2x1
jax: 0.10.0
libtpu: 0.0.40
codegen_flags: <defaults>
</compile_context>

<pallas_src>
import math

import jax
import jax.numpy as jnp
from jax.experimental import pallas as pl
from jax.experimental.pallas import tpu as pltpu  # noqa: F401

# small, forward-consistent shapes
B = 2              # batch
S = 8              # seq len
H = 32             # hidden size
H2 = H // 2        # 16
L = 10             # config.NUM_SYNDROME_LABELS
D = 6              # config.NUM_DISEASE_LABELS
VOCAB = 64         # stand-in vocab for the base model embedding
OUT_PAD = 128      # lane-dense fused output width (syn: 0..9, dis: 10..15)
OUT_ROWS = 8       # sublane-padded output rows (rows 0..B-1 valid)

# ---- weight-slab row offsets (each block starts on an 8-row boundary) ----
R_WQKV = 0      # 32 rows : [wq*scale | wk | wv | 0]           cols 0:128
R_BQKV = 32     # 1 row   : [bq*scale | bk | bv | 0]           cols 0:128
R_WO   = 40     # 32 rows : output_proj weight                 cols 0:32
R_BO   = 72     # 1 row   : output_proj bias                   cols 0:32
R_WT   = 80     # 32 rows : feature_transform weight           cols 0:16
R_BT   = 112    # 1 row   : feature_transform bias             cols 0:16
R_WA   = 120    # 16 rows : attention_weights weight           cols 0:10
R_BA   = 136    # 1 row   : attention_weights bias             cols 0:10
R_WSC  = 144    # 1 row   : syndrome_classifier w^T (0:32), bias (32:33)
R_WSF  = 152    # 10 rows : syndrome_feature_transform weight  cols 0:16
R_BSF  = 168    # 1 row   : syndrome_feature_transform bias    cols 0:16
R_WDC  = 176    # 48 rows : disease_classifier weight          cols 0:6
R_BDC  = 224    # 1 row   : disease_classifier bias            cols 0:6
SLAB_ROWS = 232


def tcm_kernel(hs_ref, emask_ref, w_ref, out_ref):
    hs = hs_ref[...]                                   # [B, S, H]
    hs2 = hs.reshape(B * S, H)                         # [16, 32]
    emask = emask_ref[...]                             # [B, S] additive mask

    # ---------------- fused QKV projection (scale pre-folded into Q) --------
    qkv = jnp.dot(hs2, w_ref[R_WQKV:R_WQKV + H, :],
                  preferred_element_type=jnp.float32) + w_ref[R_BQKV:R_BQKV + 1, :]
    q3 = qkv[:, 0:H].reshape(B, S, H)
    k3 = qkv[:, H:2 * H].reshape(B, S, H)
    v3 = qkv[:, 2 * H:3 * H].reshape(B, S, H)

    # raw attention scores (b1-invariant, already scaled by 1/sqrt(H))
    scores = jnp.einsum('bsk,btk->bst', q3, k3,
                        preferred_element_type=jnp.float32)          # [B, S, S]

    # PyTorch [B,1,1,S] + [B,S,S] broadcast -> [B1, B2, S, S]
    masked = scores[None, :, :, :] + emask[:, None, None, :]         # [B, B, S, S]
    masked = masked.reshape(B * B, S, S)                             # x = b1*B + b2

    # softmax over the key axis (exp -> EUP, reciprocal -> EUP)
    m = jnp.max(masked, axis=-1, keepdims=True)
    e = jnp.exp(masked - m)
    probs = e * pl.reciprocal(jnp.sum(e, axis=-1, keepdims=True), approx=True)

    # value broadcasts over b1: v_st[x] = v3[x % B]
    v_st = jnp.concatenate([v3, v3], axis=0)                         # [B*B, S, H]
    context = jnp.einsum('xst,xth->xsh', probs, v_st,
                         preferred_element_type=jnp.float32)         # [B*B, S, H]

    # output projection on the fully flattened batch
    ctx2 = context.reshape(B * B * S, H)                             # [32, 32]
    enhanced = (jnp.dot(ctx2, w_ref[R_WO:R_WO + H, 0:H],
                        preferred_element_type=jnp.float32)
                + w_ref[R_BO:R_BO + 1, 0:H])                         # [32, 32]

    # ---- LabelAttention: joint softmax over all (b2, s) positions per b1 ---
    transformed = jnp.tanh(
        jnp.dot(enhanced, w_ref[R_WT:R_WT + H, 0:H2],
                preferred_element_type=jnp.float32) + w_ref[R_BT:R_BT + 1, 0:H2])
    aw = (jnp.dot(transformed, w_ref[R_WA:R_WA + H2, 0:L],
                  preferred_element_type=jnp.float32)
          + w_ref[R_BA:R_BA + 1, 0:L])                               # [32, L]

    aw3 = aw.reshape(B, B * S, L)                                    # [B1, B2*S, L]
    mj = jnp.max(aw3, axis=1, keepdims=True)
    ej = jnp.exp(aw3 - mj)
    awp = ej * pl.reciprocal(jnp.sum(ej, axis=1, keepdims=True), approx=True)

    enh3 = enhanced.reshape(B, B * S, H)                             # [B1, B2*S, H]
    lf = jnp.einsum('axl,axh->alh', awp, enh3,
                    preferred_element_type=jnp.float32)              # [B1, L, H]

    # ---------------------------- syndrome head -----------------------------
    wsc_row = w_ref[R_WSC:R_WSC + 1, 0:H]                            # [1, H]
    bsc = w_ref[R_WSC:R_WSC + 1, H:H + 1]                            # [1, 1]
    syn = jnp.sum(lf * wsc_row[None, :, :], axis=-1) + bsc           # [B, L]

    # ---------------------------- disease head ------------------------------
    syn_probs = jax.nn.sigmoid(syn)                                  # [B, L] (no labels)
    syn_ctx = (jnp.dot(syn_probs, w_ref[R_WSF:R_WSF + L, 0:H2],
                       preferred_element_type=jnp.float32)
               + w_ref[R_BSF:R_BSF + 1, 0:H2])                       # [B, H2]
    cls = hs[:, 0, :]                                                # [B, H]
    comb = jnp.concatenate([cls, syn_ctx], axis=-1)                  # [B, H+H2]
    dis = (jnp.dot(comb, w_ref[R_WDC:R_WDC + H + H2, 0:D],
                   preferred_element_type=jnp.float32)
           + w_ref[R_BDC:R_BDC + 1, 0:D])                            # [B, D]

    # ------------- fused lane-dense output, single full-vreg store ----------
    row = jnp.concatenate(
        [syn, dis, jnp.zeros((B, OUT_PAD - L - D), jnp.float32)], axis=-1)   # [B, 128]
    out_ref[...] = jnp.concatenate(
        [row, jnp.zeros((OUT_ROWS - B, OUT_PAD), jnp.float32)], axis=0)      # [8, 128]


def make_params(key):
    def lin(k, fan_in, fan_out):
        k1, k2 = jax.random.split(k)
        bound = 1.0 / math.sqrt(fan_in)
        w = jax.random.uniform(k1, (fan_in, fan_out), jnp.float32, -bound, bound)
        b = jax.random.uniform(k2, (1, fan_out), jnp.float32, -bound, bound)
        return w, b

    keys = jax.random.split(key, 10)
    p = {}
    p['wq'], p['bq'] = lin(keys[0], H, H)                  # query_proj
    p['wk'], p['bk'] = lin(keys[1], H, H)                  # key_proj
    p['wv'], p['bv'] = lin(keys[2], H, H)                  # value_proj
    p['wo'], p['bo'] = lin(keys[3], H, H)                  # output_proj
    p['wt'], p['bt'] = lin(keys[4], H, H2)                 # feature_transform
    p['wa'], p['ba'] = lin(keys[5], H2, L)                 # attention_weights
    p['wsc'], p['bsc'] = lin(keys[6], H, 1)                # syndrome_classifier
    p['wsf'], p['bsf'] = lin(keys[7], L, H2)               # syndrome_feature_transform
    p['wdc'], p['bdc'] = lin(keys[8], H + H2, D)           # disease_classifier
    return p


def pack_weights(params):
    """Pack all weights/biases into one lane-dense [SLAB_ROWS, 128] f32 slab (done once)."""
    scale = 1.0 / math.sqrt(H)

    def blk(w, rows):
        r, c = w.shape
        return jnp.pad(w.astype(jnp.float32), ((0, rows - r), (0, OUT_PAD - c)))

    pieces = [
        (jnp.concatenate([params['wq'] * scale, params['wk'], params['wv']], axis=1), 32),
        (jnp.concatenate([params['bq'] * scale, params['bk'], params['bv']], axis=1), 8),
        (params['wo'], 32), (params['bo'], 8),
        (params['wt'], 32), (params['bt'], 8),
        (params['wa'], 16), (params['ba'], 8),
        (jnp.concatenate([params['wsc'].T, params['bsc']], axis=1), 8),
        (params['wsf'], 16), (params['bsf'], 8),
        (params['wdc'], 48), (params['bdc'], 8),
    ]
    slab = jnp.concatenate([blk(w, r) for w, r in pieces], axis=0)
    assert slab.shape == (SLAB_ROWS, OUT_PAD)
    return slab


def tcm_forward(sequence_output, attention_mask, weight_slab):
    # precompute the additive attention mask once in the wrapper
    ext_mask = (1.0 - attention_mask.astype(jnp.float32)) * -10000.0      # [B, S]

    # single invocation (no grid): everything fits trivially in VMEM and the
    # b1-invariant work is shared instead of recomputed per grid step.
    fused = pl.pallas_call(
        tcm_kernel,
        out_shape=jax.ShapeDtypeStruct((OUT_ROWS, OUT_PAD), jnp.float32),
    )(sequence_output, ext_mask, weight_slab)

    syn = fused[:B, :L]                                                   # [B, L]
    dis = fused[:B, L:L + D]                                              # [B, D]
    return syn, dis


if __name__ == "__main__":
    key = jax.random.PRNGKey(0)
    k_emb, k_ids, k_params = jax.random.split(key, 3)

    params = make_params(k_params)
    weight_slab = pack_weights(params)        # built once ("init time")

    # TODO(synk): the pretrained HuggingFace AutoModel base encoder has no clean
    # Pallas equivalent here; it is replaced by a deterministic embedding lookup
    # producing `sequence_output` [B, S, H] (the kernel covers everything after it).
    embedding = jax.random.normal(k_emb, (VOCAB, H), jnp.float32) * 0.02
    input_ids = jax.random.randint(k_ids, (B, S), 0, VOCAB)
    attention_mask = jnp.ones((B, S), jnp.float32)
    sequence_output = jnp.take(embedding, input_ids, axis=0)   # [B, S, H]

    syn_logits, dis_logits = tcm_forward(sequence_output, attention_mask, weight_slab)
    syn_logits, dis_logits = jax.block_until_ready((syn_logits, dis_logits))

    assert syn_logits.shape == (B, L)
    assert dis_logits.shape == (B, D)
    assert bool(jnp.isfinite(syn_logits).all())
    assert bool(jnp.isfinite(dis_logits).all())
    print("KERNEL_OK")
</pallas_src>

<mosaic_0001>
module attributes {stable_mosaic.version = 11 : i64} {
  func.func @tcm_kernel(%arg0: memref<2x8x32xf32, #tpu.memory_space<vmem>>, %arg1: memref<2x8xf32, #tpu.memory_space<vmem>>, %arg2: memref<232x128xf32, #tpu.memory_space<vmem>>, %arg3: memref<8x128xf32, #tpu.memory_space<vmem>>) attributes {dimension_semantics = [], scalar_prefetch = 0 : i64, scratch_operands = 0 : i64, tpu.core_type = #tpu.core_type<tc>} {
    %c0 = arith.constant 0 : index
    %c0_0 = arith.constant 0 : index
    %c0_1 = arith.constant 0 : index
    %0 = vector.load %arg0[%c0, %c0_0, %c0_1] : memref<2x8x32xf32, #tpu.memory_space<vmem>>, vector<2x8x32xf32>
    %1 = vector.shape_cast %0 : vector<2x8x32xf32> to vector<16x32xf32>
    %c0_2 = arith.constant 0 : index
    %c0_3 = arith.constant 0 : index
    %2 = vector.load %arg1[%c0_2, %c0_3] : memref<2x8xf32, #tpu.memory_space<vmem>>, vector<2x8xf32>
    %c0_4 = arith.constant 0 : index
    %c0_5 = arith.constant 0 : index
    %3 = vector.load %arg2[%c0_4, %c0_5] : memref<232x128xf32, #tpu.memory_space<vmem>>, vector<32x128xf32>
    %cst = arith.constant dense<0.000000e+00> : vector<16x128xf32>
    %4 = tpu.matmul %1, %3, %cst {dimension_numbers = #tpu.dot_dimension_numbers<[1], [0], [0], [1], [0, 0, 1, 1], [], []>} : vector<16x32xf32>, vector<32x128xf32>, vector<16x128xf32> -> vector<16x128xf32>
    %c32 = arith.constant 32 : index
    %c0_6 = arith.constant 0 : index
    %5 = vector.load %arg2[%c32, %c0_6] : memref<232x128xf32, #tpu.memory_space<vmem>>, vector<1x128xf32>
    %6 = vector.broadcast %5 : vector<1x128xf32> to vector<16x128xf32>
    %7 = arith.addf %4, %6 : vector<16x128xf32>
    %8 = vector.extract_strided_slice %7 {offsets = [0, 0], sizes = [16, 32], strides = [1, 1]} : vector<16x128xf32> to vector<16x32xf32>
    %9 = vector.shape_cast %8 : vector<16x32xf32> to vector<2x8x32xf32>
    %10 = vector.extract_strided_slice %7 {offsets = [0, 32], sizes = [16, 32], strides = [1, 1]} : vector<16x128xf32> to vector<16x32xf32>
    %11 = vector.shape_cast %10 : vector<16x32xf32> to vector<2x8x32xf32>
    %12 = vector.extract_strided_slice %7 {offsets = [0, 64], sizes = [16, 32], strides = [1, 1]} : vector<16x128xf32> to vector<16x32xf32>
    %13 = vector.shape_cast %12 : vector<16x32xf32> to vector<2x8x32xf32>
    "tpu.trace_start"() <{level = 10 : i32, message = "bsk,btk->bst"}> : () -> ()
    %cst_7 = arith.constant dense<0.000000e+00> : vector<2x8x8xf32>
    %14 = tpu.matmul %9, %11, %cst_7 {dimension_numbers = #tpu.dot_dimension_numbers<[2], [2], [1], [1], [0, 0, 0, 1, 1, 1], [0], [0]>} : vector<2x8x32xf32>, vector<2x8x32xf32>, vector<2x8x8xf32> -> vector<2x8x8xf32>
    "tpu.trace_stop"() : () -> ()
    %15 = vector.shape_cast %14 : vector<2x8x8xf32> to vector<1x2x8x8xf32>
    %16 = vector.shape_cast %2 : vector<2x8xf32> to vector<2x1x1x8xf32>
    %17 = vector.broadcast %15 : vector<1x2x8x8xf32> to vector<2x2x8x8xf32>
    %18 = vector.broadcast %16 : vector<2x1x1x8xf32> to vector<2x2x8x8xf32>
    %19 = arith.addf %17, %18 : vector<2x2x8x8xf32>
    %20 = vector.shape_cast %19 : vector<2x2x8x8xf32> to vector<4x8x8xf32>
    %cst_8 = arith.constant dense<0xFF800000> : vector<4x8xf32>
    %21 = vector.multi_reduction <maximumf>, %20, %cst_8 [2] : vector<4x8x8xf32> to vector<4x8xf32>
    %22 = vector.shape_cast %21 : vector<4x8xf32> to vector<4x8x1xf32>
    %23 = vector.broadcast %22 : vector<4x8x1xf32> to vector<4x8x8xf32>
    %24 = arith.subf %20, %23 : vector<4x8x8xf32>
    %25 = math.exp %24 : vector<4x8x8xf32>
    %cst_9 = arith.constant dense<0.000000e+00> : vector<4x8xf32>
    %26 = vector.multi_reduction <add>, %25, %cst_9 [2] : vector<4x8x8xf32> to vector<4x8xf32>
    %27 = vector.shape_cast %26 : vector<4x8xf32> to vector<4x8x1xf32>
    %28 = tpu.reciprocal %27 {approx = true} : vector<4x8x1xf32> -> vector<4x8x1xf32>
    %29 = vector.broadcast %28 : vector<4x8x1xf32> to vector<4x8x8xf32>
    %30 = arith.mulf %25, %29 : vector<4x8x8xf32>
    %31 = tpu.concatenate %13, %13 in 0 : vector<2x8x32xf32>, vector<2x8x32xf32> -> vector<4x8x32xf32>
    "tpu.trace_start"() <{level = 10 : i32, message = "xst,xth->xsh"}> : () -> ()
    %cst_10 = arith.constant dense<0.000000e+00> : vector<4x8x32xf32>
    %32 = tpu.matmul %30, %31, %cst_10 {dimension_numbers = #tpu.dot_dimension_numbers<[2], [1], [1], [2], [0, 0, 0, 1, 1, 2], [0], [0]>} : vector<4x8x8xf32>, vector<4x8x32xf32>, vector<4x8x32xf32> -> vector<4x8x32xf32>
    "tpu.trace_stop"() : () -> ()
    %33 = vector.shape_cast %32 : vector<4x8x32xf32> to vector<32x32xf32>
    %c40 = arith.constant 40 : index
    %c0_11 = arith.constant 0 : index
    %34 = vector.load %arg2[%c40, %c0_11] : memref<232x128xf32, #tpu.memory_space<vmem>>, vector<32x32xf32>
    %cst_12 = arith.constant dense<0.000000e+00> : vector<32x32xf32>
    %35 = tpu.matmul %33, %34, %cst_12 {dimension_numbers = #tpu.dot_dimension_numbers<[1], [0], [0], [1], [0, 0, 1, 1], [], []>} : vector<32x32xf32>, vector<32x32xf32>, vector<32x32xf32> -> vector<32x32xf32>
    %c72 = arith.constant 72 : index
    %c0_13 = arith.constant 0 : index
    %36 = vector.load %arg2[%c72, %c0_13] : memref<232x128xf32, #tpu.memory_space<vmem>>, vector<1x32xf32>
    %37 = vector.broadcast %36 : vector<1x32xf32> to vector<32x32xf32>
    %38 = arith.addf %35, %37 : vector<32x32xf32>
    %c80 = arith.constant 80 : index
    %c0_14 = arith.constant 0 : index
    %39 = vector.load %arg2[%c80, %c0_14] : memref<232x128xf32, #tpu.memory_space<vmem>>, vector<32x16xf32>
    %cst_15 = arith.constant dense<0.000000e+00> : vector<32x16xf32>
    %40 = tpu.matmul %38, %39, %cst_15 {dimension_numbers = #tpu.dot_dimension_numbers<[1], [0], [0], [1], [0, 0, 1, 1], [], []>} : vector<32x32xf32>, vector<32x16xf32>, vector<32x16xf32> -> vector<32x16xf32>
    %c112 = arith.constant 112 : index
    %c0_16 = arith.constant 0 : index
    %41 = vector.load %arg2[%c112, %c0_16] : memref<232x128xf32, #tpu.memory_space<vmem>>, vector<1x16xf32>
    %42 = vector.broadcast %41 : vector<1x16xf32> to vector<32x16xf32>
    %43 = arith.addf %40, %42 : vector<32x16xf32>
    %44 = math.tanh %43 : vector<32x16xf32>
    %c120 = arith.constant 120 : index
    %c0_17 = arith.constant 0 : index
    %45 = vector.load %arg2[%c120, %c0_17] : memref<232x128xf32, #tpu.memory_space<vmem>>, vector<16x10xf32>
    %cst_18 = arith.constant dense<0.000000e+00> : vector<32x10xf32>
    %46 = tpu.matmul %44, %45, %cst_18 {dimension_numbers = #tpu.dot_dimension_numbers<[1], [0], [0], [1], [0, 0, 1, 1], [], []>} : vector<32x16xf32>, vector<16x10xf32>, vector<32x10xf32> -> vector<32x10xf32>
    %c136 = arith.constant 136 : index
    %c0_19 = arith.constant 0 : index
    %47 = vector.load %arg2[%c136, %c0_19] : memref<232x128xf32, #tpu.memory_space<vmem>>, vector<1x10xf32>
    %48 = vector.broadcast %47 : vector<1x10xf32> to vector<32x10xf32>
    %49 = arith.addf %46, %48 : vector<32x10xf32>
    %50 = vector.shape_cast %49 : vector<32x10xf32> to vector<2x16x10xf32>
    %cst_20 = arith.constant dense<0xFF800000> : vector<2x10xf32>
    %51 = vector.multi_reduction <maximumf>, %50, %cst_20 [1] : vector<2x16x10xf32> to vector<2x10xf32>
    %52 = vector.shape_cast %51 : vector<2x10xf32> to vector<2x1x10xf32>
    %53 = vector.broadcast %52 : vector<2x1x10xf32> to vector<2x16x10xf32>
    %54 = arith.subf %50, %53 : vector<2x16x10xf32>
    %55 = math.exp %54 : vector<2x16x10xf32>
    %cst_21 = arith.constant dense<0.000000e+00> : vector<2x10xf32>
    %56 = vector.multi_reduction <add>, %55, %cst_21 [1] : vector<2x16x10xf32> to vector<2x10xf32>
    %57 = vector.shape_cast %56 : vector<2x10xf32> to vector<2x1x10xf32>
    %58 = tpu.reciprocal %57 {approx = true} : vector<2x1x10xf32> -> vector<2x1x10xf32>
    %59 = vector.broadcast %58 : vector<2x1x10xf32> to vector<2x16x10xf32>
    %60 = arith.mulf %55, %59 : vector<2x16x10xf32>
    %61 = vector.shape_cast %38 : vector<32x32xf32> to vector<2x16x32xf32>
    "tpu.trace_start"() <{level = 10 : i32, message = "axl,axh->alh"}> : () -> ()
    %cst_22 = arith.constant dense<0.000000e+00> : vector<2x10x32xf32>
    %62 = tpu.matmul %60, %61, %cst_22 {dimension_numbers = #tpu.dot_dimension_numbers<[1], [1], [2], [2], [0, 0, 0, 2, 1, 2], [0], [0]>} : vector<2x16x10xf32>, vector<2x16x32xf32>, vector<2x10x32xf32> -> vector<2x10x32xf32>
    "tpu.trace_stop"() : () -> ()
    %c144 = arith.constant 144 : index
    %c0_23 = arith.constant 0 : index
    %63 = vector.load %arg2[%c144, %c0_23] : memref<232x128xf32, #tpu.memory_space<vmem>>, vector<1x32xf32>
    %c144_24 = arith.constant 144 : index
    %c32_25 = arith.constant 32 : index
    %64 = vector.load %arg2[%c144_24, %c32_25] : memref<232x128xf32, #tpu.memory_space<vmem>>, vector<1x1xf32>
    %65 = vector.shape_cast %63 : vector<1x32xf32> to vector<1x1x32xf32>
    %66 = vector.broadcast %65 : vector<1x1x32xf32> to vector<2x10x32xf32>
    %67 = arith.mulf %62, %66 : vector<2x10x32xf32>
    %cst_26 = arith.constant dense<0.000000e+00> : vector<2x10xf32>
    %68 = vector.multi_reduction <add>, %67, %cst_26 [2] : vector<2x10x32xf32> to vector<2x10xf32>
    %69 = vector.broadcast %64 : vector<1x1xf32> to vector<2x10xf32>
    %70 = arith.addf %68, %69 : vector<2x10xf32>
    %71 = arith.negf %70 : vector<2x10xf32>
    %72 = math.exp %71 : vector<2x10xf32>
    %cst_27 = arith.constant 1.000000e+00 : f32
    %73 = vector.broadcast %cst_27 : f32 to vector<2x10xf32>
    %74 = arith.addf %73, %72 : vector<2x10xf32>
    %75 = arith.divf %73, %74 : vector<2x10xf32>
    %c152 = arith.constant 152 : index
    %c0_28 = arith.constant 0 : index
    %76 = vector.load %arg2[%c152, %c0_28] : memref<232x128xf32, #tpu.memory_space<vmem>>, vector<10x16xf32>
    %cst_29 = arith.constant dense<0.000000e+00> : vector<2x16xf32>
    %77 = tpu.matmul %75, %76, %cst_29 {dimension_numbers = #tpu.dot_dimension_numbers<[1], [0], [0], [1], [0, 0, 1, 1], [], []>} : vector<2x10xf32>, vector<10x16xf32>, vector<2x16xf32> -> vector<2x16xf32>
    %c168 = arith.constant 168 : index
    %c0_30 = arith.constant 0 : index
    %78 = vector.load %arg2[%c168, %c0_30] : memref<232x128xf32, #tpu.memory_space<vmem>>, vector<1x16xf32>
    %79 = vector.broadcast %78 : vector<1x16xf32> to vector<2x16xf32>
    %80 = arith.addf %77, %79 : vector<2x16xf32>
    %81 = vector.extract_strided_slice %0 {offsets = [0, 0, 0], sizes = [2, 1, 32], strides = [1, 1, 1]} : vector<2x8x32xf32> to vector<2x1x32xf32>
    %82 = vector.shape_cast %81 : vector<2x1x32xf32> to vector<2x32xf32>
    %83 = tpu.concatenate %82, %80 in 1 : vector<2x32xf32>, vector<2x16xf32> -> vector<2x48xf32>
    %c176 = arith.constant 176 : index
    %c0_31 = arith.constant 0 : index
    %84 = vector.load %arg2[%c176, %c0_31] : memref<232x128xf32, #tpu.memory_space<vmem>>, vector<48x6xf32>
    %cst_32 = arith.constant dense<0.000000e+00> : vector<2x6xf32>
    %85 = tpu.matmul %83, %84, %cst_32 {dimension_numbers = #tpu.dot_dimension_numbers<[1], [0], [0], [1], [0, 0, 1, 1], [], []>} : vector<2x48xf32>, vector<48x6xf32>, vector<2x6xf32> -> vector<2x6xf32>
    %c224 = arith.constant 224 : index
    %c0_33 = arith.constant 0 : index
    %86 = vector.load %arg2[%c224, %c0_33] : memref<232x128xf32, #tpu.memory_space<vmem>>, vector<1x6xf32>
    %87 = vector.broadcast %86 : vector<1x6xf32> to vector<2x6xf32>
    %88 = arith.addf %85, %87 : vector<2x6xf32>
    %cst_34 = arith.constant 0.000000e+00 : f32
    %89 = vector.broadcast %cst_34 : f32 to vector<2x112xf32>
    %90 = tpu.concatenate %70, %88, %89 in 1 : vector<2x10xf32>, vector<2x6xf32>, vector<2x112xf32> -> vector<2x128xf32>
    %cst_35 = arith.constant 0.000000e+00 : f32
    %91 = vector.broadcast %cst_35 : f32 to vector<6x128xf32>
    %92 = tpu.concatenate %90, %91 in 0 : vector<2x128xf32>, vector<6x128xf32> -> vector<8x128xf32>
    %c0_36 = arith.constant 0 : index
    %c0_37 = arith.constant 0 : index
    %93 = vector.load %arg3[%c0_36, %c0_37] : memref<8x128xf32, #tpu.memory_space<vmem>>, vector<8x128xf32>
    tpu.vector_store %arg3[%c0_36, %c0_37], %92 {strides = array<i32>} : memref<8x128xf32, #tpu.memory_space<vmem>>, vector<8x128xf32>,
    return
  }
}

</mosaic_0001>

<llo_original>
// kernel: tpu_custom_call.1
$region0: #{tpu_custom_call.1}
  #allocation0 [shape = 'u32[]', space=smem, size = 0x4, offset = 0x4, fixed_abs, tag = 'smem constant byte address 0x4 - core index']
  #allocation1 [shape = 'u32[144,128]{1,0:T(1,128)}', space=vmem, size = 0x12000, scoped, tag = 'internal scratch']
  %s0 = inlined_call_operand.hbm [shape: f32[2,8,32], index: 0, kind: input, shape index: {}]
  %s1 = inlined_call_operand.vmem [shape: f32[2,8], index: 1, kind: input, shape index: {}]
  %s2 = inlined_call_operand.hbm [shape: f32[232,128], index: 2, kind: input, shape index: {}]
  %s3 = inlined_call_operand.hbm [shape: f32[8,128], index: 3, kind: output, shape index: {}]
  %s4 = sld [smem:[#allocation0]]
  $region30: #{tpu_custom_call.1} parent=0
    _
  %s6 = ssub.s32 1, %s4
  %s7 = scalar_select 0, %s6, %s4
  $region1: #{tpu_custom_call.1} parent=0
    #allocation2 [shape = 'u8[8192]{0}', space=vmem, size = 0x2000, scoped, tag = 'input window, operand 0, single buffered']
    #allocation3 [shape = 's32[1]{0}', space=sflag, size = 0x4, scoped, tag = 'scoped memory for tpu_custom_call.1']
    #allocation4 [shape = 's32[1]{0}', space=sflag, size = 0x4, scoped, tag = 'scoped memory for tpu_custom_call.1']
    #allocation5 [shape = 'u8[118784]{0}', space=vmem, size = 0x1d000, scoped, tag = 'input window, operand 2, single buffered']
    #allocation6 [shape = 's32[1]{0}', space=sflag, size = 0x4, scoped, tag = 'scoped memory for tpu_custom_call.1']
    #allocation7 [shape = 'u8[4096]{0}', space=vmem, size = 0x1000, scoped, tag = 'output window, operand 0, single buffered']
    %8 = vsyncpa [#allocation3], 0
    %9 = vsyncpa [#allocation6], 0
    %10 = vsyncpa [#allocation4], 0
    // Predicated region
    $region2: #{tpu_custom_call.1} parent=1 // pred_check
      _
    $region3: #{tpu_custom_call.1} parent=1 // pred_check_branch
      %12 = sbr.rel (0) target = $region5
    $region4: #{tpu_custom_call.1} parent=1 // pred_region
      %s14 = ssub.s32 256, 256
      %15 = vsyncadd [#allocation3], %s14
      %s16 = sshll.u32 [#allocation2], 4
      %s17 = int_to_ptr.vmem [resolvable:$true] %s16
      %22 = dma.hbm_to_vmem [thread:$0]  %s0, 256, %s17, [#allocation3], 128, 128, 8
    $region5: #{tpu_custom_call.1} parent=1 // pred_fallthru
      _
    // Predicated region
    $region6: #{tpu_custom_call.1} parent=1 // pred_check
      _
    $region7: #{tpu_custom_call.1} parent=1 // pred_check_branch
      %24 = sbr.rel (0) target = $region9
    $region8: #{tpu_custom_call.1} parent=1 // pred_region
      _
    $region9: #{tpu_custom_call.1} parent=1 // pred_fallthru
      _
    // Predicated region
    $region10: #{tpu_custom_call.1} parent=1 // pred_check
      _
    $region11: #{tpu_custom_call.1} parent=1 // pred_check_branch
      %26 = sbr.rel (0) target = $region13
    $region12: #{tpu_custom_call.1} parent=1 // pred_region
      %s28 = ssub.s32 3712, 3712
      %29 = vsyncadd [#allocation6], %s28
      %s30 = sshll.u32 [#allocation5], 4
      %s31 = int_to_ptr.vmem [resolvable:$true] %s30
      %36 = dma.hbm_to_vmem [thread:$0]  %s2, 3712, %s31, [#allocation6], 128, 128, 8
    $region13: #{tpu_custom_call.1} parent=1 // pred_fallthru
      _
    // Predicated region
    $region14: #{tpu_custom_call.1} parent=1 // pred_check
      _
    $region15: #{tpu_custom_call.1} parent=1 // pred_check_branch
      %38 = sbr.rel (0) target = $region17
    $region16: #{tpu_custom_call.1} parent=1 // pred_region
      %39 = dma.done [#allocation3], 256
    $region17: #{tpu_custom_call.1} parent=1 // pred_fallthru
      _
    // Predicated region
    $region18: #{tpu_custom_call.1} parent=1 // pred_check
      _
    $region19: #{tpu_custom_call.1} parent=1 // pred_check_branch
      %41 = sbr.rel (0) target = $region21
    $region20: #{tpu_custom_call.1} parent=1 // pred_region
      %42 = dma.done [#allocation6], 3712
    $region21: #{tpu_custom_call.1} parent=1 // pred_fallthru
      _
    %v43 = vld [vmem:[#allocation2] sm:$0xff]
    %v44 = vld [vmem:[#allocation2 + $0x8] sm:$0xff]
    %v45 = vld [vmem:[%s1] sm:$0x3]
    %v46 = vld [vmem:[#allocation5] sm:$0xff]
    %v47 = vld [vmem:[#allocation5 + $0x8] sm:$0xff]
    %v48 = vld [vmem:[#allocation5 + $0x10] sm:$0xff]
    %v49 = vld [vmem:[#allocation5 + $0x18] sm:$0xff]
    %v50 = vld [vmem:[#allocation5 + $0x20] sm:$0x1]
    %v51 = vlaneseq
    %v52 = vshrl.u32 %v51, 7
    %v53 = vsub.s32 0, %v52
    %v54 = vrot.slane %v50, %v53
    %vm55 = vcmask 261120
    %v57 = vsel %vm55, %v43, 0
    %v60 = vsel %vm55, %v44, 0
    %62 = vmatprep.subr.mxu0 0.0
    %63 = vmatpush1.msra.mxu0 %v46
    %64 = vmatprep.subr.mxu0 0.0
    %65 = vmatpush1.msra.mxu0 %v47
    %66 = vmatprep.subr.mxu0 0.0
    %67 = vmatpush1.msra.mxu0 %v48
    %68 = vmatprep.subr.mxu0 0.0
    %69 = vmatpush1.msra.mxu0 %v49
    %70 = vmatprep.subr.mxu0 0.0
    %71 = vmatpush1.msra.mxu0 0.0
    %72 = vmatprep.subr.mxu0 0.0
    %73 = vmatpush1.msra.mxu0 0.0
    %74 = vmatprep.subr.mxu0 0.0
    %75 = vmatpush1.msra.mxu0 0.0
    %76 = vmatprep.subr.mxu0 0.0
    %77 = vmatpush1.msra.mxu0 0.0
    %78 = vmatprep.subr.mxu0 0.0
    %79 = vmatpush1.msra.mxu0 0.0
    %80 = vmatprep.subr.mxu0 0.0
    %81 = vmatpush1.msra.mxu0 0.0
    %82 = vmatprep.subr.mxu0 0.0
    %83 = vmatpush1.msra.mxu0 0.0
    %84 = vmatprep.subr.mxu0 0.0
    %85 = vmatpush1.msra.mxu0 0.0
    %86 = vmatprep.subr.mxu0 0.0
    %87 = vmatpush1.msra.mxu0 0.0
    %88 = vmatprep.subr.mxu0 0.0
    %89 = vmatpush1.msra.mxu0 0.0
    %90 = vmatprep.subr.mxu0 0.0
    %91 = vmatpush1.msra.mxu0 0.0
    %92 = vmatprep.subr.mxu0 0.0
    %93 = vmatpush1.msra.mxu0 0.0
    %94 = vmatprep.subr.mxu0 0.0
    %95 = vmatpush1.msra.mxu0 0.0
    %96 = vmatprep.subr.mxu0 0.0
    %97 = vmatpush1.msra.mxu0 0.0
    %98 = vmatprep.subr.mxu0 0.0
    %99 = vmatpush1.msra.mxu0 0.0
    %100 = vmatprep.subr.mxu0 0.0
    %101 = vmatpush1.msra.mxu0 0.0
    %102 = vmatprep.subr.mxu0 0.0
    %103 = vmatpush1.msra.mxu0 0.0
    %104 = vmatprep.subr.mxu0 0.0
    %105 = vmatpush1.msra.mxu0 0.0
    %106 = vmatprep.subr.mxu0 0.0
    %107 = vmatpush1.msra.mxu0 0.0
    %108 = vmatprep.subr.mxu0 0.0
    %109 = vmatpush1.msra.mxu0 0.0
    %110 = vmatprep.subr.mxu0 0.0
    %111 = vmatpush1.msra.mxu0 0.0
    %112 = vmatprep.subr.mxu0 0.0
    %113 = vmatpush1.msra.mxu0 0.0
    %114 = vmatprep.subr.mxu0 0.0
    %115 = vmatpush1.msra.mxu0 0.0
    %116 = vmatprep.subr.mxu0 0.0
    %117 = vmatpush1.msra.mxu0 0.0
    %118 = vmatprep.subr.mxu0 0.0
    %119 = vmatpush1.msra.mxu0 0.0
    %120 = vmatprep.subr.mxu0 0.0
    %121 = vmatpush1.msra.mxu0 0.0
    %122 = vmatprep.subr.mxu0 0.0
    %123 = vmatpush1.msra.mxu0 0.0
    %124 = vmatprep.subr.mxu0 0.0
    %125 = vmatpush1.msra.mxu0 0.0
    %126 = vmatprep.mubr.f32.mxu0 0.0
    %127 = vmatmul.mubr.f32.gmra.mrb[0].mxu0 %v57
    %v128 = vpop.f32.mrb[0].mxu0
    %v129 = vadd.f32 %v54, %v128
    %v130 = vpop.f32.mrb[0].mxu0
    %131 = vmatprep.mubr.f32.mxu0 0.0
    %132 = vmatmul.mubr.f32.gmra.mrb[0].mxu0 %v60
    %v133 = vpop.f32.mrb[0].mxu0
    %v134 = vadd.f32 %v54, %v133
    %v135 = vpop.f32.mrb[0].mxu0
    %136 = vdwg.mxu0
    %138 = vrot.lane.b32.xlu0 %v129, 96
    %v139 = vpop.permute.xlu0 %138
    %v140 = vsel %vm55, %v129, 0
    %v142 = vsel %vm55, %v139, 0
    %144 = vmatprep.subr.mxu0 0.0
    %145 = vmatpush1.xpose.msra.mxu0 %v142
    %146 = vmatprep.subr.mxu0 0.0
    %147 = vmatpush1.xpose.msra.mxu0 0.0
    %148 = vmatprep.subr.mxu0 0.0
    %149 = vmatpush1.xpose.msra.mxu0 0.0
    %150 = vmatprep.subr.mxu0 0.0
    %151 = vmatpush1.xpose.msra.mxu0 0.0
    %152 = vmatprep.subr.mxu0 0.0
    %153 = vmatpush1.xpose.msra.mxu0 0.0
    %154 = vmatprep.subr.mxu0 0.0
    %155 = vmatpush1.xpose.msra.mxu0 0.0
    %156 = vmatprep.subr.mxu0 0.0
    %157 = vmatpush1.xpose.msra.mxu0 0.0
    %158 = vmatprep.subr.mxu0 0.0
    %159 = vmatpush1.xpose.msra.mxu0 0.0
    %160 = vmatprep.subr.mxu0 0.0
    %161 = vmatpush1.xpose.msra.mxu0 0.0
    %162 = vmatprep.subr.mxu0 0.0
    %163 = vmatpush1.xpose.msra.mxu0 0.0
    %164 = vmatprep.subr.mxu0 0.0
    %165 = vmatpush1.xpose.msra.mxu0 0.0
    %166 = vmatprep.subr.mxu0 0.0
    %167 = vmatpush1.xpose.msra.mxu0 0.0
    %168 = vmatprep.subr.mxu0 0.0
    %169 = vmatpush1.xpose.msra.mxu0 0.0
    %170 = vmatprep.subr.mxu0 0.0
    %171 = vmatpush1.xpose.msra.mxu0 0.0
    %172 = vmatprep.subr.mxu0 0.0
    %173 = vmatpush1.xpose.msra.mxu0 0.0
    %174 = vmatprep.subr.mxu0 0.0
    %175 = vmatpush1.xpose.msra.mxu0 0.0
    %176 = vmatprep.subr.mxu0 0.0
    %177 = vmatpush1.xpose.msra.mxu0 0.0
    %178 = vmatprep.subr.mxu0 0.0
    %179 = vmatpush1.xpose.msra.mxu0 0.0
    %180 = vmatprep.subr.mxu0 0.0
    %181 = vmatpush1.xpose.msra.mxu0 0.0
    %182 = vmatprep.subr.mxu0 0.0
    %183 = vmatpush1.xpose.msra.mxu0 0.0
    %184 = vmatprep.subr.mxu0 0.0
    %185 = vmatpush1.xpose.msra.mxu0 0.0
    %186 = vmatprep.subr.mxu0 0.0
    %187 = vmatpush1.xpose.msra.mxu0 0.0
    %188 = vmatprep.subr.mxu0 0.0
    %189 = vmatpush1.xpose.msra.mxu0 0.0
    %190 = vmatprep.subr.mxu0 0.0
    %191 = vmatpush1.xpose.msra.mxu0 0.0
    %192 = vmatprep.subr.mxu0 0.0
    %193 = vmatpush1.xpose.msra.mxu0 0.0
    %194 = vmatprep.subr.mxu0 0.0
    %195 = vmatpush1.xpose.msra.mxu0 0.0
    %196 = vmatprep.subr.mxu0 0.0
    %197 = vmatpush1.xpose.msra.mxu0 0.0
    %198 = vmatprep.subr.mxu0 0.0
    %199 = vmatpush1.xpose.msra.mxu0 0.0
    %200 = vmatprep.subr.mxu0 0.0
    %201 = vmatpush1.xpose.msra.mxu0 0.0
    %202 = vmatprep.subr.mxu0 0.0
    %203 = vmatpush1.xpose.msra.mxu0 0.0
    %204 = vmatprep.subr.mxu0 0.0
    %205 = vmatpush1.xpose.msra.mxu0 0.0
    %206 = vmatprep.subr.mxu0 0.0
    %207 = vmatpush1.xpose.msra.mxu0 0.0
    %208 = vmatprep.mubr.f32.mxu0 0.0
    %209 = vmatmul.mubr.f32.gmra.mrb[0].mxu0 %v140
    %v210 = vpop.f32.mrb[0].mxu0
    %v211 = vadd.f32 0.0, %v210
    %v212 = vpop.f32.mrb[0].mxu0
    %213 = vdwg.mxu0
    %215 = vrot.lane.b32.xlu0 %v134, 96
    %v216 = vpop.permute.xlu0 %215
    %v217 = vsel %vm55, %v134, 0
    %v219 = vsel %vm55, %v216, 0
    %221 = vmatprep.subr.mxu0 0.0
    %222 = vmatpush1.xpose.msra.mxu0 %v219
    %223 = vmatprep.subr.mxu0 0.0
    %224 = vmatpush1.xpose.msra.mxu0 0.0
    %225 = vmatprep.subr.mxu0 0.0
    %226 = vmatpush1.xpose.msra.mxu0 0.0
    %227 = vmatprep.subr.mxu0 0.0
    %228 = vmatpush1.xpose.msra.mxu0 0.0
    %229 = vmatprep.subr.mxu0 0.0
    %230 = vmatpush1.xpose.msra.mxu0 0.0
    %231 = vmatprep.subr.mxu0 0.0
    %232 = vmatpush1.xpose.msra.mxu0 0.0
    %233 = vmatprep.subr.mxu0 0.0
    %234 = vmatpush1.xpose.msra.mxu0 0.0
    %235 = vmatprep.subr.mxu0 0.0
    %236 = vmatpush1.xpose.msra.mxu0 0.0
    %237 = vmatprep.subr.mxu0 0.0
    %238 = vmatpush1.xpose.msra.mxu0 0.0
    %239 = vmatprep.subr.mxu0 0.0
    %240 = vmatpush1.xpose.msra.mxu0 0.0
    %241 = vmatprep.subr.mxu0 0.0
    %242 = vmatpush1.xpose.msra.mxu0 0.0
    %243 = vmatprep.subr.mxu0 0.0
    %244 = vmatpush1.xpose.msra.mxu0 0.0
    %245 = vmatprep.subr.mxu0 0.0
    %246 = vmatpush1.xpose.msra.mxu0 0.0
    %247 = vmatprep.subr.mxu0 0.0
    %248 = vmatpush1.xpose.msra.mxu0 0.0
    %249 = vmatprep.subr.mxu0 0.0
    %250 = vmatpush1.xpose.msra.mxu0 0.0
    %251 = vmatprep.subr.mxu0 0.0
    %252 = vmatpush1.xpose.msra.mxu0 0.0
    %253 = vmatprep.subr.mxu0 0.0
    %254 = vmatpush1.xpose.msra.mxu0 0.0
    %255 = vmatprep.subr.mxu0 0.0
    %256 = vmatpush1.xpose.msra.mxu0 0.0
    %257 = vmatprep.subr.mxu0 0.0
    %258 = vmatpush1.xpose.msra.mxu0 0.0
    %259 = vmatprep.subr.mxu0 0.0
    %260 = vmatpush1.xpose.msra.mxu0 0.0
    %261 = vmatprep.subr.mxu0 0.0
    %262 = vmatpush1.xpose.msra.mxu0 0.0
    %263 = vmatprep.subr.mxu0 0.0
    %264 = vmatpush1.xpose.msra.mxu0 0.0
    %265 = vmatprep.subr.mxu0 0.0
    %266 = vmatpush1.xpose.msra.mxu0 0.0
    %267 = vmatprep.subr.mxu0 0.0
    %268 = vmatpush1.xpose.msra.mxu0 0.0
    %269 = vmatprep.subr.mxu0 0.0
    %270 = vmatpush1.xpose.msra.mxu0 0.0
    %271 = vmatprep.subr.mxu0 0.0
    %272 = vmatpush1.xpose.msra.mxu0 0.0
    %273 = vmatprep.subr.mxu0 0.0
    %274 = vmatpush1.xpose.msra.mxu0 0.0
    %275 = vmatprep.subr.mxu0 0.0
    %276 = vmatpush1.xpose.msra.mxu0 0.0
    %277 = vmatprep.subr.mxu0 0.0
    %278 = vmatpush1.xpose.msra.mxu0 0.0
    %279 = vmatprep.subr.mxu0 0.0
    %280 = vmatpush1.xpose.msra.mxu0 0.0
    %281 = vmatprep.subr.mxu0 0.0
    %282 = vmatpush1.xpose.msra.mxu0 0.0
    %283 = vmatprep.subr.mxu0 0.0
    %284 = vmatpush1.xpose.msra.mxu0 0.0
    %285 = vmatprep.mubr.f32.mxu0 0.0
    %286 = vmatmul.mubr.f32.gmra.mrb[0].mxu0 %v217
    %v287 = vpop.f32.mrb[0].mxu0
    %v288 = vadd.f32 0.0, %v287
    %v289 = vpop.f32.mrb[0].mxu0
    %290 = vdwg.mxu0
    %v293 = vunpack.c.l.s4 1966171168
    %v294 = vunpack.c.0.s8 %v293
    %v295 = vlaneseq
    %v296 = vshrl.u32 %v295, 7
    %v297 = vsub.s32 %v294, %v296
    %v298 = vrot.slane %v45, %v297
    %v299 = vcombine.high %v298, %v298
    %v301 = vunpack.c.l.s4 1966171168
    %v302 = vunpack.c.0.s8 %v301
    %v303 = vlaneseq
    %v304 = vshrl.u32 %v303, 7
    %v305 = vsub.s32 %v302, %v304
    %v306 = vrot.slane %v298, %v305
    %v308 = vunpack.c.l.s4 1966171168
    %v309 = vunpack.c.0.s8 %v308
    %v310 = vlaneseq
    %v311 = vshrl.u32 %v310, 7
    %v312 = vsub.s32 %v309, %v311
    %v313 = vrot.slane %v299, %v312
    %v314 = vlaneseq
    %v315 = vshrl.u32 %v314, 7
    %v316 = vsub.s32 0, %v315
    %v317 = vrot.slane %v306, %v316
    %v318 = vlaneseq
    %v319 = vshrl.u32 %v318, 7
    %v320 = vsub.s32 0, %v319
    %v321 = vrot.slane %v313, %v320
    %v324 = vadd.f32 %v211, %v317
    %v325 = vadd.f32 %v288, %v317
    %v326 = vadd.f32 %v211, %v321
    %v327 = vadd.f32 %v288, %v321
    %vm328 = vcmask 64512
    %v329 = vsel %vm328, %v324, -inf
    %330 = vmax.xlane.f32.xlu0 %v329
    %v331 = vpop.xlane.xlu0 %330
    %v332 = vsel %vm328, %v325, -inf
    %333 = vmax.xlane.f32.xlu0 %v332
    %v334 = vpop.xlane.xlu0 %333
    %v335 = vsel %vm328, %v326, -inf
    %336 = vmax.xlane.f32.xlu0 %v335
    %v337 = vpop.xlane.xlu0 %336
    %v338 = vsel %vm328, %v327, -inf
    %339 = vmax.xlane.f32.xlu0 %v338
    %v340 = vpop.xlane.xlu0 %339
    %v341 = vsub.f32 %v324, %v331
    %v342 = vsub.f32 %v325, %v334
    %v343 = vsub.f32 %v326, %v337
    %v344 = vsub.f32 %v327, %v340
    %v345 = vmul.f32 %v341, 1.442695
    %v346 = vpow.pop %v345
    %v347 = vmul.f32 %v342, 1.442695
    %v348 = vpow.pop %v347
    %v349 = vmul.f32 %v343, 1.442695
    %v350 = vpow.pop %v349
    %v351 = vmul.f32 %v344, 1.442695
    %v352 = vpow.pop %v351
    %v353 = vsel %vm328, %v346, 0.0
    %354 = vadd.xlane.f32.xlu0 %v353
    %v355 = vpop.xlane.xlu0 %354
    %v356 = vsel %vm328, %v348, 0.0
    %357 = vadd.xlane.f32.xlu0 %v356
    %v358 = vpop.xlane.xlu0 %357
    %v359 = vsel %vm328, %v350, 0.0
    %360 = vadd.xlane.f32.xlu0 %v359
    %v361 = vpop.xlane.xlu0 %360
    %v362 = vsel %vm328, %v352, 0.0
    %363 = vadd.xlane.f32.xlu0 %v362
    %v364 = vpop.xlane.xlu0 %363
    %v365 = vrcp.pop %v355
    %v366 = vrcp.pop %v358
    %v367 = vrcp.pop %v361
    %v368 = vrcp.pop %v364
    %v369 = vmul.f32 %v346, %v365
    %v370 = vmul.f32 %v348, %v366
    %v371 = vmul.f32 %v350, %v367
    %v372 = vmul.f32 %v352, %v368
    %373 = vrot.lane.b32.xlu0 %v129, 64
    %v374 = vpop.permute.xlu0 %373
    %v377 = vsel %vm328, %v369, 0
    %379 = vmatprep.subr.mxu0 0.0
    %380 = vmatpush1.msra.mxu0 %v374
    %381 = vmatprep.subr.mxu0 0.0
    %382 = vmatpush1.msra.mxu0 0.0
    %383 = vmatprep.subr.mxu0 0.0
    %384 = vmatpush1.msra.mxu0 0.0
    %385 = vmatprep.subr.mxu0 0.0
    %386 = vmatpush1.msra.mxu0 0.0
    %387 = vmatprep.subr.mxu0 0.0
    %388 = vmatpush1.msra.mxu0 0.0
    %389 = vmatprep.subr.mxu0 0.0
    %390 = vmatpush1.msra.mxu0 0.0
    %391 = vmatprep.subr.mxu0 0.0
    %392 = vmatpush1.msra.mxu0 0.0
    %393 = vmatprep.subr.mxu0 0.0
    %394 = vmatpush1.msra.mxu0 0.0
    %395 = vmatprep.subr.mxu0 0.0
    %396 = vmatpush1.msra.mxu0 0.0
    %397 = vmatprep.subr.mxu0 0.0
    %398 = vmatpush1.msra.mxu0 0.0
    %399 = vmatprep.subr.mxu0 0.0
    %400 = vmatpush1.msra.mxu0 0.0
    %401 = vmatprep.subr.mxu0 0.0
    %402 = vmatpush1.msra.mxu0 0.0
    %403 = vmatprep.subr.mxu0 0.0
    %404 = vmatpush1.msra.mxu0 0.0
    %405 = vmatprep.subr.mxu0 0.0
    %406 = vmatpush1.msra.mxu0 0.0
    %407 = vmatprep.subr.mxu0 0.0
    %408 = vmatpush1.msra.mxu0 0.0
    %409 = vmatprep.subr.mxu0 0.0
    %410 = vmatpush1.msra.mxu0 0.0
    %411 = vmatprep.subr.mxu0 0.0
    %412 = vmatpush1.msra.mxu0 0.0
    %413 = vmatprep.subr.mxu0 0.0
    %414 = vmatpush1.msra.mxu0 0.0
    %415 = vmatprep.subr.mxu0 0.0
    %416 = vmatpush1.msra.mxu0 0.0
    %417 = vmatprep.subr.mxu0 0.0
    %418 = vmatpush1.msra.mxu0 0.0
    %419 = vmatprep.subr.mxu0 0.0
    %420 = vmatpush1.msra.mxu0 0.0
    %421 = vmatprep.subr.mxu0 0.0
    %422 = vmatpush1.msra.mxu0 0.0
    %423 = vmatprep.subr.mxu0 0.0
    %424 = vmatpush1.msra.mxu0 0.0
    %425 = vmatprep.subr.mxu0 0.0
    %426 = vmatpush1.msra.mxu0 0.0
    %427 = vmatprep.subr.mxu0 0.0
    %428 = vmatpush1.msra.mxu0 0.0
    %429 = vmatprep.subr.mxu0 0.0
    %430 = vmatpush1.msra.mxu0 0.0
    %431 = vmatprep.subr.mxu0 0.0
    %432 = vmatpush1.msra.mxu0 0.0
    %433 = vmatprep.subr.mxu0 0.0
    %434 = vmatpush1.msra.mxu0 0.0
    %435 = vmatprep.subr.mxu0 0.0
    %436 = vmatpush1.msra.mxu0 0.0
    %437 = vmatprep.subr.mxu0 0.0
    %438 = vmatpush1.msra.mxu0 0.0
    %439 = vmatprep.subr.mxu0 0.0
    %440 = vmatpush1.msra.mxu0 0.0
    %441 = vmatprep.subr.mxu0 0.0
    %442 = vmatpush1.msra.mxu0 0.0
    %443 = vmatprep.mubr.f32.mxu0 0.0
    %444 = vmatmul.mubr.f32.gmra.mrb[0].mxu0 %v377
    %v445 = vpop.f32.mrb[0].mxu0
    %v446 = vadd.f32 0.0, %v445
    %v447 = vpop.f32.mrb[0].mxu0
    %448 = vdwg.mxu0
    %449 = vrot.lane.b32.xlu0 %v134, 64
    %v450 = vpop.permute.xlu0 %449
    %v453 = vsel %vm328, %v370, 0
    %455 = vmatprep.subr.mxu0 0.0
    %456 = vmatpush1.msra.mxu0 %v450
    %457 = vmatprep.subr.mxu0 0.0
    %458 = vmatpush1.msra.mxu0 0.0
    %459 = vmatprep.subr.mxu0 0.0
    %460 = vmatpush1.msra.mxu0 0.0
    %461 = vmatprep.subr.mxu0 0.0
    %462 = vmatpush1.msra.mxu0 0.0
    %463 = vmatprep.subr.mxu0 0.0
    %464 = vmatpush1.msra.mxu0 0.0
    %465 = vmatprep.subr.mxu0 0.0
    %466 = vmatpush1.msra.mxu0 0.0
    %467 = vmatprep.subr.mxu0 0.0
    %468 = vmatpush1.msra.mxu0 0.0
    %469 = vmatprep.subr.mxu0 0.0
    %470 = vmatpush1.msra.mxu0 0.0
    %471 = vmatprep.subr.mxu0 0.0
    %472 = vmatpush1.msra.mxu0 0.0
    %473 = vmatprep.subr.mxu0 0.0
    %474 = vmatpush1.msra.mxu0 0.0
    %475 = vmatprep.subr.mxu0 0.0
    %476 = vmatpush1.msra.mxu0 0.0
    %477 = vmatprep.subr.mxu0 0.0
    %478 = vmatpush1.msra.mxu0 0.0
    %479 = vmatprep.subr.mxu0 0.0
    %480 = vmatpush1.msra.mxu0 0.0
    %481 = vmatprep.subr.mxu0 0.0
    %482 = vmatpush1.msra.mxu0 0.0
    %483 = vmatprep.subr.mxu0 0.0
    %484 = vmatpush1.msra.mxu0 0.0
    %485 = vmatprep.subr.mxu0 0.0
    %486 = vmatpush1.msra.mxu0 0.0
    %487 = vmatprep.subr.mxu0 0.0
    %488 = vmatpush1.msra.mxu0 0.0
    %489 = vmatprep.subr.mxu0 0.0
    %490 = vmatpush1.msra.mxu0 0.0
    %491 = vmatprep.subr.mxu0 0.0
    %492 = vmatpush1.msra.mxu0 0.0
    %493 = vmatprep.subr.mxu0 0.0
    %494 = vmatpush1.msra.mxu0 0.0
    %495 = vmatprep.subr.mxu0 0.0
    %496 = vmatpush1.msra.mxu0 0.0
    %497 = vmatprep.subr.mxu0 0.0
    %498 = vmatpush1.msra.mxu0 0.0
    %499 = vmatprep.subr.mxu0 0.0
    %500 = vmatpush1.msra.mxu0 0.0
    %501 = vmatprep.subr.mxu0 0.0
    %502 = vmatpush1.msra.mxu0 0.0
    %503 = vmatprep.subr.mxu0 0.0
    %504 = vmatpush1.msra.mxu0 0.0
    %505 = vmatprep.subr.mxu0 0.0
    %506 = vmatpush1.msra.mxu0 0.0
    %507 = vmatprep.subr.mxu0 0.0
    %508 = vmatpush1.msra.mxu0 0.0
    %509 = vmatprep.subr.mxu0 0.0
    %510 = vmatpush1.msra.mxu0 0.0
    %511 = vmatprep.subr.mxu0 0.0
    %512 = vmatpush1.msra.mxu0 0.0
    %513 = vmatprep.subr.mxu0 0.0
    %514 = vmatpush1.msra.mxu0 0.0
    %515 = vmatprep.subr.mxu0 0.0
    %516 = vmatpush1.msra.mxu0 0.0
    %517 = vmatprep.subr.mxu0 0.0
    %518 = vmatpush1.msra.mxu0 0.0
    %519 = vmatprep.mubr.f32.mxu0 0.0
    %520 = vmatmul.mubr.f32.gmra.mrb[0].mxu0 %v453
    %v521 = vpop.f32.mrb[0].mxu0
    %v522 = vadd.f32 0.0, %v521
    %v523 = vpop.f32.mrb[0].mxu0
    %524 = vdwg.mxu0
    %v526 = vsel %vm328, %v371, 0
    %528 = vmatprep.subr.mxu0 0.0
    %529 = vmatpush1.msra.mxu0 %v374
    %530 = vmatprep.subr.mxu0 0.0
    %531 = vmatpush1.msra.mxu0 0.0
    %532 = vmatprep.subr.mxu0 0.0
    %533 = vmatpush1.msra.mxu0 0.0
    %534 = vmatprep.subr.mxu0 0.0
    %535 = vmatpush1.msra.mxu0 0.0
    %536 = vmatprep.subr.mxu0 0.0
    %537 = vmatpush1.msra.mxu0 0.0
    %538 = vmatprep.subr.mxu0 0.0
    %539 = vmatpush1.msra.mxu0 0.0
    %540 = vmatprep.subr.mxu0 0.0
    %541 = vmatpush1.msra.mxu0 0.0
    %542 = vmatprep.subr.mxu0 0.0
    %543 = vmatpush1.msra.mxu0 0.0
    %544 = vmatprep.subr.mxu0 0.0
    %545 = vmatpush1.msra.mxu0 0.0
    %546 = vmatprep.subr.mxu0 0.0
    %547 = vmatpush1.msra.mxu0 0.0
    %548 = vmatprep.subr.mxu0 0.0
    %549 = vmatpush1.msra.mxu0 0.0
    %550 = vmatprep.subr.mxu0 0.0
    %551 = vmatpush1.msra.mxu0 0.0
    %552 = vmatprep.subr.mxu0 0.0
    %553 = vmatpush1.msra.mxu0 0.0
    %554 = vmatprep.subr.mxu0 0.0
    %555 = vmatpush1.msra.mxu0 0.0
    %556 = vmatprep.subr.mxu0 0.0
    %557 = vmatpush1.msra.mxu0 0.0
    %558 = vmatprep.subr.mxu0 0.0
    %559 = vmatpush1.msra.mxu0 0.0
    %560 = vmatprep.subr.mxu0 0.0
    %561 = vmatpush1.msra.mxu0 0.0
    %562 = vmatprep.subr.mxu0 0.0
    %563 = vmatpush1.msra.mxu0 0.0
    %564 = vmatprep.subr.mxu0 0.0
    %565 = vmatpush1.msra.mxu0 0.0
    %566 = vmatprep.subr.mxu0 0.0
    %567 = vmatpush1.msra.mxu0 0.0
    %568 = vmatprep.subr.mxu0 0.0
    %569 = vmatpush1.msra.mxu0 0.0
    %570 = vmatprep.subr.mxu0 0.0
    %571 = vmatpush1.msra.mxu0 0.0
    %572 = vmatprep.subr.mxu0 0.0
    %573 = vmatpush1.msra.mxu0 0.0
    %574 = vmatprep.subr.mxu0 0.0
    %575 = vmatpush1.msra.mxu0 0.0
    %576 = vmatprep.subr.mxu0 0.0
    %577 = vmatpush1.msra.mxu0 0.0
    %578 = vmatprep.subr.mxu0 0.0
    %579 = vmatpush1.msra.mxu0 0.0
    %580 = vmatprep.subr.mxu0 0.0
    %581 = vmatpush1.msra.mxu0 0.0
    %582 = vmatprep.subr.mxu0 0.0
    %583 = vmatpush1.msra.mxu0 0.0
    %584 = vmatprep.subr.mxu0 0.0
    %585 = vmatpush1.msra.mxu0 0.0
    %586 = vmatprep.subr.mxu0 0.0
    %587 = vmatpush1.msra.mxu0 0.0
    %588 = vmatprep.subr.mxu0 0.0
    %589 = vmatpush1.msra.mxu0 0.0
    %590 = vmatprep.subr.mxu0 0.0
    %591 = vmatpush1.msra.mxu0 0.0
    %592 = vmatprep.mubr.f32.mxu0 0.0
    %593 = vmatmul.mubr.f32.gmra.mrb[0].mxu0 %v526
    %v594 = vpop.f32.mrb[0].mxu0
    %v595 = vadd.f32 0.0, %v594
    %v596 = vpop.f32.mrb[0].mxu0
    %597 = vdwg.mxu0
    %v599 = vsel %vm328, %v372, 0
    %601 = vmatprep.subr.mxu0 0.0
    %602 = vmatpush1.msra.mxu0 %v450
    %603 = vmatprep.subr.mxu0 0.0
    %604 = vmatpush1.msra.mxu0 0.0
    %605 = vmatprep.subr.mxu0 0.0
    %606 = vmatpush1.msra.mxu0 0.0
    %607 = vmatprep.subr.mxu0 0.0
    %608 = vmatpush1.msra.mxu0 0.0
    %609 = vmatprep.subr.mxu0 0.0
    %610 = vmatpush1.msra.mxu0 0.0
    %611 = vmatprep.subr.mxu0 0.0
    %612 = vmatpush1.msra.mxu0 0.0
    %613 = vmatprep.subr.mxu0 0.0
    %614 = vmatpush1.msra.mxu0 0.0
    %615 = vmatprep.subr.mxu0 0.0
    %616 = vmatpush1.msra.mxu0 0.0
    %617 = vmatprep.subr.mxu0 0.0
    %618 = vmatpush1.msra.mxu0 0.0
    %619 = vmatprep.subr.mxu0 0.0
    %620 = vmatpush1.msra.mxu0 0.0
    %621 = vmatprep.subr.mxu0 0.0
    %622 = vmatpush1.msra.mxu0 0.0
    %623 = vmatprep.subr.mxu0 0.0
    %624 = vmatpush1.msra.mxu0 0.0
    %625 = vmatprep.subr.mxu0 0.0
    %626 = vmatpush1.msra.mxu0 0.0
    %627 = vmatprep.subr.mxu0 0.0
    %628 = vmatpush1.msra.mxu0 0.0
    %629 = vmatprep.subr.mxu0 0.0
    %630 = vmatpush1.msra.mxu0 0.0
    %631 = vmatprep.subr.mxu0 0.0
    %632 = vmatpush1.msra.mxu0 0.0
    %633 = vmatprep.subr.mxu0 0.0
    %634 = vmatpush1.msra.mxu0 0.0
    %635 = vmatprep.subr.mxu0 0.0
    %636 = vmatpush1.msra.mxu0 0.0
    %637 = vmatprep.subr.mxu0 0.0
    %638 = vmatpush1.msra.mxu0 0.0
    %639 = vmatprep.subr.mxu0 0.0
    %640 = vmatpush1.msra.mxu0 0.0
    %641 = vmatprep.subr.mxu0 0.0
    %642 = vmatpush1.msra.mxu0 0.0
    %643 = vmatprep.subr.mxu0 0.0
    %644 = vmatpush1.msra.mxu0 0.0
    %645 = vmatprep.subr.mxu0 0.0
    %646 = vmatpush1.msra.mxu0 0.0
    %647 = vmatprep.subr.mxu0 0.0
    %648 = vmatpush1.msra.mxu0 0.0
    %649 = vmatprep.subr.mxu0 0.0
    %650 = vmatpush1.msra.mxu0 0.0
    %651 = vmatprep.subr.mxu0 0.0
    %652 = vmatpush1.msra.mxu0 0.0
    %653 = vmatprep.subr.mxu0 0.0
    %654 = vmatpush1.msra.mxu0 0.0
    %655 = vmatprep.subr.mxu0 0.0
    %656 = vmatpush1.msra.mxu0 0.0
    %657 = vmatprep.subr.mxu0 0.0
    %658 = vmatpush1.msra.mxu0 0.0
    %659 = vmatprep.subr.mxu0 0.0
    %660 = vmatpush1.msra.mxu0 0.0
    %661 = vmatprep.subr.mxu0 0.0
    %662 = vmatpush1.msra.mxu0 0.0
    %663 = vmatprep.subr.mxu0 0.0
    %664 = vmatpush1.msra.mxu0 0.0
    %665 = vmatprep.mubr.f32.mxu0 0.0
    %666 = vmatmul.mubr.f32.gmra.mrb[0].mxu0 %v599
    %v667 = vpop.f32.mrb[0].mxu0
    %v668 = vadd.f32 0.0, %v667
    %v669 = vpop.f32.mrb[0].mxu0
    %670 = vdwg.mxu0
    %v671 = vld [vmem:[#allocation5 + $0x28] sm:$0xff]
    %v672 = vld [vmem:[#allocation5 + $0x30] sm:$0xff]
    %v673 = vld [vmem:[#allocation5 + $0x38] sm:$0xff]
    %v674 = vld [vmem:[#allocation5 + $0x40] sm:$0xff]
    %v675 = vld [vmem:[#allocation5 + $0x48] sm:$0x1]
    %v676 = vlaneseq
    %v677 = vshrl.u32 %v676, 7
    %v678 = vsub.s32 0, %v677
    %v679 = vrot.slane %v675, %v678
    %v681 = vsel %vm55, %v446, 0
    %v684 = vsel %vm55, %v522, 0
    %v687 = vsel %vm55, %v595, 0
    %v690 = vsel %vm55, %v668, 0
    %692 = vmatprep.subr.mxu0 0.0
    %693 = vmatpush1.msra.mxu0 %v671
    %694 = vmatprep.subr.mxu0 0.0
    %695 = vmatpush1.msra.mxu0 %v672
    %696 = vmatprep.subr.mxu0 0.0
    %697 = vmatpush1.msra.mxu0 %v673
    %698 = vmatprep.subr.mxu0 0.0
    %699 = vmatpush1.msra.mxu0 %v674
    %700 = vmatprep.subr.mxu0 0.0
    %701 = vmatpush1.msra.mxu0 0.0
    %702 = vmatprep.subr.mxu0 0.0
    %703 = vmatpush1.msra.mxu0 0.0
    %704 = vmatprep.subr.mxu0 0.0
    %705 = vmatpush1.msra.mxu0 0.0
    %706 = vmatprep.subr.mxu0 0.0
    %707 = vmatpush1.msra.mxu0 0.0
    %708 = vmatprep.subr.mxu0 0.0
    %709 = vmatpush1.msra.mxu0 0.0
    %710 = vmatprep.subr.mxu0 0.0
    %711 = vmatpush1.msra.mxu0 0.0
    %712 = vmatprep.subr.mxu0 0.0
    %713 = vmatpush1.msra.mxu0 0.0
    %714 = vmatprep.subr.mxu0 0.0
    %715 = vmatpush1.msra.mxu0 0.0
    %716 = vmatprep.subr.mxu0 0.0
    %717 = vmatpush1.msra.mxu0 0.0
    %718 = vmatprep.subr.mxu0 0.0
    %719 = vmatpush1.msra.mxu0 0.0
    %720 = vmatprep.subr.mxu0 0.0
    %721 = vmatpush1.msra.mxu0 0.0
    %722 = vmatprep.subr.mxu0 0.0
    %723 = vmatpush1.msra.mxu0 0.0
    %724 = vmatprep.subr.mxu0 0.0
    %725 = vmatpush1.msra.mxu0 0.0
    %726 = vmatprep.subr.mxu0 0.0
    %727 = vmatpush1.msra.mxu0 0.0
    %728 = vmatprep.subr.mxu0 0.0
    %729 = vmatpush1.msra.mxu0 0.0
    %730 = vmatprep.subr.mxu0 0.0
    %731 = vmatpush1.msra.mxu0 0.0
    %732 = vmatprep.subr.mxu0 0.0
    %733 = vmatpush1.msra.mxu0 0.0
    %734 = vmatprep.subr.mxu0 0.0
    %735 = vmatpush1.msra.mxu0 0.0
    %736 = vmatprep.subr.mxu0 0.0
    %737 = vmatpush1.msra.mxu0 0.0
    %738 = vmatprep.subr.mxu0 0.0
    %739 = vmatpush1.msra.mxu0 0.0
    %740 = vmatprep.subr.mxu0 0.0
    %741 = vmatpush1.msra.mxu0 0.0
    %742 = vmatprep.subr.mxu0 0.0
    %743 = vmatpush1.msra.mxu0 0.0
    %744 = vmatprep.subr.mxu0 0.0
    %745 = vmatpush1.msra.mxu0 0.0
    %746 = vmatprep.subr.mxu0 0.0
    %747 = vmatpush1.msra.mxu0 0.0
    %748 = vmatprep.subr.mxu0 0.0
    %749 = vmatpush1.msra.mxu0 0.0
    %750 = vmatprep.subr.mxu0 0.0
    %751 = vmatpush1.msra.mxu0 0.0
    %752 = vmatprep.subr.mxu0 0.0
    %753 = vmatpush1.msra.mxu0 0.0
    %754 = vmatprep.subr.mxu0 0.0
    %755 = vmatpush1.msra.mxu0 0.0
    %756 = vmatprep.mubr.f32.mxu0 0.0
    %757 = vmatmul.mubr.f32.gmra.mrb[0].mxu0 %v681
    %v758 = vpop.f32.mrb[0].mxu0
    %v759 = vadd.f32 %v679, %v758
    %v760 = vpop.f32.mrb[0].mxu0
    %761 = vmatprep.mubr.f32.mxu0 0.0
    %762 = vmatmul.mubr.f32.gmra.mrb[0].mxu0 %v684
    %v763 = vpop.f32.mrb[0].mxu0
    %v764 = vadd.f32 %v679, %v763
    %v765 = vpop.f32.mrb[0].mxu0
    %766 = vmatprep.mubr.f32.mxu0 0.0
    %767 = vmatmul.mubr.f32.gmra.mrb[0].mxu0 %v687
    %v768 = vpop.f32.mrb[0].mxu0
    %v769 = vadd.f32 %v679, %v768
    %v770 = vpop.f32.mrb[0].mxu0
    %771 = vmatprep.mubr.f32.mxu0 0.0
    %772 = vmatmul.mubr.f32.gmra.mrb[0].mxu0 %v690
    %v773 = vpop.f32.mrb[0].mxu0
    %v774 = vadd.f32 %v679, %v773
    %v775 = vpop.f32.mrb[0].mxu0
    %776 = vdwg.mxu0
    %v777 = vld [vmem:[#allocation5 + $0x50] sm:$0xff]
    %v778 = vld [vmem:[#allocation5 + $0x58] sm:$0xff]
    %v779 = vld [vmem:[#allocation5 + $0x60] sm:$0xff]
    %v780 = vld [vmem:[#allocation5 + $0x68] sm:$0xff]
    %v781 = vld [vmem:[#allocation5 + $0x70] sm:$0x1]
    %v782 = vlaneseq
    %v783 = vshrl.u32 %v782, 7
    %v784 = vsub.s32 0, %v783
    %v785 = vrot.slane %v781, %v784
    %v787 = vsel %vm55, %v759, 0
    %v790 = vsel %vm55, %v764, 0
    %v793 = vsel %vm55, %v769, 0
    %v796 = vsel %vm55, %v774, 0
    %798 = vmatprep.subr.mxu0 0.0
    %799 = vmatpush1.msra.mxu0 %v777
    %800 = vmatprep.subr.mxu0 0.0
    %801 = vmatpush1.msra.mxu0 %v778
    %802 = vmatprep.subr.mxu0 0.0
    %803 = vmatpush1.msra.mxu0 %v779
    %804 = vmatprep.subr.mxu0 0.0
    %805 = vmatpush1.msra.mxu0 %v780
    %806 = vmatprep.subr.mxu0 0.0
    %807 = vmatpush1.msra.mxu0 0.0
    %808 = vmatprep.subr.mxu0 0.0
    %809 = vmatpush1.msra.mxu0 0.0
    %810 = vmatprep.subr.mxu0 0.0
    %811 = vmatpush1.msra.mxu0 0.0
    %812 = vmatprep.subr.mxu0 0.0
    %813 = vmatpush1.msra.mxu0 0.0
    %814 = vmatprep.subr.mxu0 0.0
    %815 = vmatpush1.msra.mxu0 0.0
    %816 = vmatprep.subr.mxu0 0.0
    %817 = vmatpush1.msra.mxu0 0.0
    %818 = vmatprep.subr.mxu0 0.0
    %819 = vmatpush1.msra.mxu0 0.0
    %820 = vmatprep.subr.mxu0 0.0
    %821 = vmatpush1.msra.mxu0 0.0
    %822 = vmatprep.subr.mxu0 0.0
    %823 = vmatpush1.msra.mxu0 0.0
    %824 = vmatprep.subr.mxu0 0.0
    %825 = vmatpush1.msra.mxu0 0.0
    %826 = vmatprep.subr.mxu0 0.0
    %827 = vmatpush1.msra.mxu0 0.0
    %828 = vmatprep.subr.mxu0 0.0
    %829 = vmatpush1.msra.mxu0 0.0
    %830 = vmatprep.subr.mxu0 0.0
    %831 = vmatpush1.msra.mxu0 0.0
    %832 = vmatprep.subr.mxu0 0.0
    %833 = vmatpush1.msra.mxu0 0.0
    %834 = vmatprep.subr.mxu0 0.0
    %835 = vmatpush1.msra.mxu0 0.0
    %836 = vmatprep.subr.mxu0 0.0
    %837 = vmatpush1.msra.mxu0 0.0
    %838 = vmatprep.subr.mxu0 0.0
    %839 = vmatpush1.msra.mxu0 0.0
    %840 = vmatprep.subr.mxu0 0.0
    %841 = vmatpush1.msra.mxu0 0.0
    %842 = vmatprep.subr.mxu0 0.0
    %843 = vmatpush1.msra.mxu0 0.0
    %844 = vmatprep.subr.mxu0 0.0
    %845 = vmatpush1.msra.mxu0 0.0
    %846 = vmatprep.subr.mxu0 0.0
    %847 = vmatpush1.msra.mxu0 0.0
    %848 = vmatprep.subr.mxu0 0.0
    %849 = vmatpush1.msra.mxu0 0.0
    %850 = vmatprep.subr.mxu0 0.0
    %851 = vmatpush1.msra.mxu0 0.0
    %852 = vmatprep.subr.mxu0 0.0
    %853 = vmatpush1.msra.mxu0 0.0
    %854 = vmatprep.subr.mxu0 0.0
    %855 = vmatpush1.msra.mxu0 0.0
    %856 = vmatprep.subr.mxu0 0.0
    %857 = vmatpush1.msra.mxu0 0.0
    %858 = vmatprep.subr.mxu0 0.0
    %859 = vmatpush1.msra.mxu0 0.0
    %860 = vmatprep.subr.mxu0 0.0
    %861 = vmatpush1.msra.mxu0 0.0
    %862 = vmatprep.mubr.f32.mxu0 0.0
    %863 = vmatmul.mubr.f32.gmra.mrb[0].mxu0 %v787
    %v864 = vpop.f32.mrb[0].mxu0
    %v865 = vadd.f32 %v785, %v864
    %v866 = vpop.f32.mrb[0].mxu0
    %867 = vmatprep.mubr.f32.mxu0 0.0
    %868 = vmatmul.mubr.f32.gmra.mrb[0].mxu0 %v790
    %v869 = vpop.f32.mrb[0].mxu0
    %v870 = vadd.f32 %v785, %v869
    %v871 = vpop.f32.mrb[0].mxu0
    %872 = vmatprep.mubr.f32.mxu0 0.0
    %873 = vmatmul.mubr.f32.gmra.mrb[0].mxu0 %v793
    %v874 = vpop.f32.mrb[0].mxu0
    %v875 = vadd.f32 %v785, %v874
    %v876 = vpop.f32.mrb[0].mxu0
    %877 = vmatprep.mubr.f32.mxu0 0.0
    %878 = vmatmul.mubr.f32.gmra.mrb[0].mxu0 %v796
    %v879 = vpop.f32.mrb[0].mxu0
    %v880 = vadd.f32 %v785, %v879
    %v881 = vpop.f32.mrb[0].mxu0
    %882 = vdwg.mxu0
    %v883 = vtanh.pop %v865
    %v884 = vtanh.pop %v870
    %v885 = vtanh.pop %v875
    %v886 = vtanh.pop %v880
    %v887 = vld [vmem:[#allocation5 + $0x78] sm:$0xff]
    %v888 = vld [vmem:[#allocation5 + $0x80] sm:$0xff]
    %v889 = vld [vmem:[#allocation5 + $0x88] sm:$0x1]
    %v890 = vlaneseq
    %v891 = vshrl.u32 %v890, 7
    %v892 = vsub.s32 0, %v891
    %v893 = vrot.slane %v889, %v892
    %vm894 = vcmask 130048
    %v896 = vsel %vm894, %v883, 0
    %v899 = vsel %vm894, %v884, 0
    %v902 = vsel %vm894, %v885, 0
    %v905 = vsel %vm894, %v886, 0
    %907 = vmatprep.subr.mxu0 0.0
    %908 = vmatpush1.msra.mxu0 %v887
    %909 = vmatprep.subr.mxu0 0.0
    %910 = vmatpush1.msra.mxu0 %v888
    %911 = vmatprep.subr.mxu0 0.0
    %912 = vmatpush1.msra.mxu0 0.0
    %913 = vmatprep.subr.mxu0 0.0
    %914 = vmatpush1.msra.mxu0 0.0
    %915 = vmatprep.subr.mxu0 0.0
    %916 = vmatpush1.msra.mxu0 0.0
    %917 = vmatprep.subr.mxu0 0.0
    %918 = vmatpush1.msra.mxu0 0.0
    %919 = vmatprep.subr.mxu0 0.0
    %920 = vmatpush1.msra.mxu0 0.0
    %921 = vmatprep.subr.mxu0 0.0
    %922 = vmatpush1.msra.mxu0 0.0
    %923 = vmatprep.subr.mxu0 0.0
    %924 = vmatpush1.msra.mxu0 0.0
    %925 = vmatprep.subr.mxu0 0.0
    %926 = vmatpush1.msra.mxu0 0.0
    %927 = vmatprep.subr.mxu0 0.0
    %928 = vmatpush1.msra.mxu0 0.0
    %929 = vmatprep.subr.mxu0 0.0
    %930 = vmatpush1.msra.mxu0 0.0
    %931 = vmatprep.subr.mxu0 0.0
    %932 = vmatpush1.msra.mxu0 0.0
    %933 = vmatprep.subr.mxu0 0.0
    %934 = vmatpush1.msra.mxu0 0.0
    %935 = vmatprep.subr.mxu0 0.0
    %936 = vmatpush1.msra.mxu0 0.0
    %937 = vmatprep.subr.mxu0 0.0
    %938 = vmatpush1.msra.mxu0 0.0
    %939 = vmatprep.subr.mxu0 0.0
    %940 = vmatpush1.msra.mxu0 0.0
    %941 = vmatprep.subr.mxu0 0.0
    %942 = vmatpush1.msra.mxu0 0.0
    %943 = vmatprep.subr.mxu0 0.0
    %944 = vmatpush1.msra.mxu0 0.0
    %945 = vmatprep.subr.mxu0 0.0
    %946 = vmatpush1.msra.mxu0 0.0
    %947 = vmatprep.subr.mxu0 0.0
    %948 = vmatpush1.msra.mxu0 0.0
    %949 = vmatprep.subr.mxu0 0.0
    %950 = vmatpush1.msra.mxu0 0.0
    %951 = vmatprep.subr.mxu0 0.0
    %952 = vmatpush1.msra.mxu0 0.0
    %953 = vmatprep.subr.mxu0 0.0
    %954 = vmatpush1.msra.mxu0 0.0
    %955 = vmatprep.subr.mxu0 0.0
    %956 = vmatpush1.msra.mxu0 0.0
    %957 = vmatprep.subr.mxu0 0.0
    %958 = vmatpush1.msra.mxu0 0.0
    %959 = vmatprep.subr.mxu0 0.0
    %960 = vmatpush1.msra.mxu0 0.0
    %961 = vmatprep.subr.mxu0 0.0
    %962 = vmatpush1.msra.mxu0 0.0
    %963 = vmatprep.subr.mxu0 0.0
    %964 = vmatpush1.msra.mxu0 0.0
    %965 = vmatprep.subr.mxu0 0.0
    %966 = vmatpush1.msra.mxu0 0.0
    %967 = vmatprep.subr.mxu0 0.0
    %968 = vmatpush1.msra.mxu0 0.0
    %969 = vmatprep.subr.mxu0 0.0
    %970 = vmatpush1.msra.mxu0 0.0
    %971 = vmatprep.mubr.f32.mxu0 0.0
    %972 = vmatmul.mubr.f32.gmra.mrb[0].mxu0 %v896
    %v973 = vpop.f32.mrb[0].mxu0
    %v974 = vadd.f32 %v893, %v973
    %v975 = vpop.f32.mrb[0].mxu0
    %976 = vmatprep.mubr.f32.mxu0 0.0
    %977 = vmatmul.mubr.f32.gmra.mrb[0].mxu0 %v899
    %v978 = vpop.f32.mrb[0].mxu0
    %v979 = vadd.f32 %v893, %v978
    %v980 = vpop.f32.mrb[0].mxu0
    %981 = vmatprep.mubr.f32.mxu0 0.0
    %982 = vmatmul.mubr.f32.gmra.mrb[0].mxu0 %v902
    %v983 = vpop.f32.mrb[0].mxu0
    %v984 = vadd.f32 %v893, %v983
    %v985 = vpop.f32.mrb[0].mxu0
    %986 = vmatprep.mubr.f32.mxu0 0.0
    %987 = vmatmul.mubr.f32.gmra.mrb[0].mxu0 %v905
    %v988 = vpop.f32.mrb[0].mxu0
    %v989 = vadd.f32 %v893, %v988
    %v990 = vpop.f32.mrb[0].mxu0
    %991 = vdwg.mxu0
    %vm992 = vcmask 80896
    %v993 = vsel %vm992, %v974, -inf
    %v994 = vsel %vm992, %v979, -inf
    %v995 = vmax.f32 %v993, %v994
    %v996 = vrot.slane %v995, 4
    %v997 = vmax.f32 %v995, %v996
    %v998 = vrot.slane %v997, 2
    %v999 = vmax.f32 %v997, %v998
    %v1000 = vrot.slane %v999, 1
    %v1001 = vmax.f32 %v999, %v1000
    %v1002 = vsel %vm992, %v984, -inf
    %v1003 = vsel %vm992, %v989, -inf
    %v1004 = vmax.f32 %v1002, %v1003
    %v1005 = vrot.slane %v1004, 4
    %v1006 = vmax.f32 %v1004, %v1005
    %v1007 = vrot.slane %v1006, 2
    %v1008 = vmax.f32 %v1006, %v1007
    %v1009 = vrot.slane %v1008, 1
    %v1010 = vmax.f32 %v1008, %v1009
    %v1011 = vsub.f32 %v974, %v1001
    %v1012 = vsub.f32 %v979, %v1001
    %v1013 = vsub.f32 %v984, %v1010
    %v1014 = vsub.f32 %v989, %v1010
    %v1015 = vmul.f32 %v1011, 1.442695
    %v1016 = vpow.pop %v1015
    %v1017 = vmul.f32 %v1012, 1.442695
    %v1018 = vpow.pop %v1017
    %v1019 = vmul.f32 %v1013, 1.442695
    %v1020 = vpow.pop %v1019
    %v1021 = vmul.f32 %v1014, 1.442695
    %v1022 = vpow.pop %v1021
    %v1023 = vsel %vm992, %v1016, 0.0
    %v1024 = vsel %vm992, %v1018, 0.0
    %v1025 = vadd.f32 %v1023, %v1024
    %v1026 = vrot.slane %v1025, 4
    %v1027 = vadd.f32 %v1025, %v1026
    %v1028 = vrot.slane %v1027, 2
    %v1029 = vadd.f32 %v1027, %v1028
    %v1030 = vrot.slane %v1029, 1
    %v1031 = vadd.f32 %v1029, %v1030
    %v1032 = vsel %vm992, %v1020, 0.0
    %v1033 = vsel %vm992, %v1022, 0.0
    %v1034 = vadd.f32 %v1032, %v1033
    %v1035 = vrot.slane %v1034, 4
    %v1036 = vadd.f32 %v1034, %v1035
    %v1037 = vrot.slane %v1036, 2
    %v1038 = vadd.f32 %v1036, %v1037
    %v1039 = vrot.slane %v1038, 1
    %v1040 = vadd.f32 %v1038, %v1039
    %v1041 = vrcp.pop %v1031
    %v1042 = vrcp.pop %v1040
    %v1043 = vmul.f32 %v1016, %v1041
    %v1044 = vmul.f32 %v1018, %v1041
    %v1045 = vmul.f32 %v1020, %v1042
    %v1046 = vmul.f32 %v1022, %v1042
    %1047 = vxpose.xlu0.b32.start [1/16] %v1043, 128
    %1048 = vxpose.xlu0.b32.cont [2/16] %v1044, 128
    %1049 = vxpose.xlu0.b32.cont [3/16] 0.0, 128
    %1050 = vxpose.xlu0.b32.cont [4/16] 0.0, 128
    %1051 = vxpose.xlu0.b32.cont [5/16] 0.0, 128
    %1052 = vxpose.xlu0.b32.cont [6/16] 0.0, 128
    %1053 = vxpose.xlu0.b32.cont [7/16] 0.0, 128
    %1054 = vxpose.xlu0.b32.cont [8/16] 0.0, 128
    %1055 = vxpose.xlu0.b32.cont [9/16] 0.0, 128
    %1056 = vxpose.xlu0.b32.cont [10/16] 0.0, 128
    %1057 = vxpose.xlu0.b32.cont [11/16] 0.0, 128
    %1058 = vxpose.xlu0.b32.cont [12/16] 0.0, 128
    %1059 = vxpose.xlu0.b32.cont [13/16] 0.0, 128
    %1060 = vxpose.xlu0.b32.cont [14/16] 0.0, 128
    %1061 = vxpose.xlu0.b32.cont [15/16] 0.0, 128
    %1062 = vxpose.xlu0.b32.end [16/16] 0.0, 128
    %v1063 = vpop.trf.xlu0
    %v1064 = vpop.trf.xlu0
    %v1065 = vpop.trf.xlu0
    %v1066 = vpop.trf.xlu0
    %v1067 = vpop.trf.xlu0
    %v1068 = vpop.trf.xlu0
    %v1069 = vpop.trf.xlu0
    %v1070 = vpop.trf.xlu0
    %v1071 = vpop.trf.xlu0
    %v1072 = vpop.trf.xlu0
    %v1073 = vpop.trf.xlu0
    %v1074 = vpop.trf.xlu0
    %v1075 = vpop.trf.xlu0
    %v1076 = vpop.trf.xlu0
    %v1077 = vpop.trf.xlu0
    %v1078 = vpop.trf.xlu0
    %v1080 = vsel %vm894, %v1063, 0
    %v1083 = vsel %vm894, %v1064, 0
    %1085 = vmatprep.subr.mxu0 0.0
    %1086 = vmatpush1.msra.mxu0 %v759
    %1087 = vmatprep.subr.mxu0 0.0
    %1088 = vmatpush1.msra.mxu0 %v764
    %1089 = vmatprep.subr.mxu0 0.0
    %1090 = vmatpush1.msra.mxu0 0.0
    %1091 = vmatprep.subr.mxu0 0.0
    %1092 = vmatpush1.msra.mxu0 0.0
    %1093 = vmatprep.subr.mxu0 0.0
    %1094 = vmatpush1.msra.mxu0 0.0
    %1095 = vmatprep.subr.mxu0 0.0
    %1096 = vmatpush1.msra.mxu0 0.0
    %1097 = vmatprep.subr.mxu0 0.0
    %1098 = vmatpush1.msra.mxu0 0.0
    %1099 = vmatprep.subr.mxu0 0.0
    %1100 = vmatpush1.msra.mxu0 0.0
    %1101 = vmatprep.subr.mxu0 0.0
    %1102 = vmatpush1.msra.mxu0 0.0
    %1103 = vmatprep.subr.mxu0 0.0
    %1104 = vmatpush1.msra.mxu0 0.0
    %1105 = vmatprep.subr.mxu0 0.0
    %1106 = vmatpush1.msra.mxu0 0.0
    %1107 = vmatprep.subr.mxu0 0.0
    %1108 = vmatpush1.msra.mxu0 0.0
    %1109 = vmatprep.subr.mxu0 0.0
    %1110 = vmatpush1.msra.mxu0 0.0
    %1111 = vmatprep.subr.mxu0 0.0
    %1112 = vmatpush1.msra.mxu0 0.0
    %1113 = vmatprep.subr.mxu0 0.0
    %1114 = vmatpush1.msra.mxu0 0.0
    %1115 = vmatprep.subr.mxu0 0.0
    %1116 = vmatpush1.msra.mxu0 0.0
    %1117 = vmatprep.subr.mxu0 0.0
    %1118 = vmatpush1.msra.mxu0 0.0
    %1119 = vmatprep.subr.mxu0 0.0
    %1120 = vmatpush1.msra.mxu0 0.0
    %1121 = vmatprep.subr.mxu0 0.0
    %1122 = vmatpush1.msra.mxu0 0.0
    %1123 = vmatprep.subr.mxu0 0.0
    %1124 = vmatpush1.msra.mxu0 0.0
    %1125 = vmatprep.subr.mxu0 0.0
    %1126 = vmatpush1.msra.mxu0 0.0
    %1127 = vmatprep.subr.mxu0 0.0
    %1128 = vmatpush1.msra.mxu0 0.0
    %1129 = vmatprep.subr.mxu0 0.0
    %1130 = vmatpush1.msra.mxu0 0.0
    %1131 = vmatprep.subr.mxu0 0.0
    %1132 = vmatpush1.msra.mxu0 0.0
    %1133 = vmatprep.subr.mxu0 0.0
    %1134 = vmatpush1.msra.mxu0 0.0
    %1135 = vmatprep.subr.mxu0 0.0
    %1136 = vmatpush1.msra.mxu0 0.0
    %1137 = vmatprep.subr.mxu0 0.0
    %1138 = vmatpush1.msra.mxu0 0.0
    %1139 = vmatprep.subr.mxu0 0.0
    %1140 = vmatpush1.msra.mxu0 0.0
    %1141 = vmatprep.subr.mxu0 0.0
    %1142 = vmatpush1.msra.mxu0 0.0
    %1143 = vmatprep.subr.mxu0 0.0
    %1144 = vmatpush1.msra.mxu0 0.0
    %1145 = vmatprep.subr.mxu0 0.0
    %1146 = vmatpush1.msra.mxu0 0.0
    %1147 = vmatprep.subr.mxu0 0.0
    %1148 = vmatpush1.msra.mxu0 0.0
    %1149 = vmatprep.mubr.f32.mxu0 0.0
    %1150 = vmatmul.mubr.f32.gmra.mrb[0].mxu0 %v1080
    %v1151 = vpop.f32.mrb[0].mxu0
    %v1152 = vadd.f32 0.0, %v1151
    %v1153 = vpop.f32.mrb[0].mxu0
    %1154 = vmatprep.mubr.f32.mxu0 0.0
    %1155 = vmatmul.mubr.f32.gmra.mrb[0].mxu0 %v1083
    %v1156 = vpop.f32.mrb[0].mxu0
    %v1157 = vadd.f32 0.0, %v1156
    %v1158 = vpop.f32.mrb[0].mxu0
    %1159 = vdwg.mxu0
    %1160 = vxpose.xlu0.b32.start [1/16] %v1045, 128
    %1161 = vxpose.xlu0.b32.cont [2/16] %v1046, 128
    %1162 = vxpose.xlu0.b32.cont [3/16] 0.0, 128
    %1163 = vxpose.xlu0.b32.cont [4/16] 0.0, 128
    %1164 = vxpose.xlu0.b32.cont [5/16] 0.0, 128
    %1165 = vxpose.xlu0.b32.cont [6/16] 0.0, 128
    %1166 = vxpose.xlu0.b32.cont [7/16] 0.0, 128
    %1167 = vxpose.xlu0.b32.cont [8/16] 0.0, 128
    %1168 = vxpose.xlu0.b32.cont [9/16] 0.0, 128
    %1169 = vxpose.xlu0.b32.cont [10/16] 0.0, 128
    %1170 = vxpose.xlu0.b32.cont [11/16] 0.0, 128
    %1171 = vxpose.xlu0.b32.cont [12/16] 0.0, 128
    %1172 = vxpose.xlu0.b32.cont [13/16] 0.0, 128
    %1173 = vxpose.xlu0.b32.cont [14/16] 0.0, 128
    %1174 = vxpose.xlu0.b32.cont [15/16] 0.0, 128
    %1175 = vxpose.xlu0.b32.end [16/16] 0.0, 128
    %v1176 = vpop.trf.xlu0
    %v1177 = vpop.trf.xlu0
    %v1178 = vpop.trf.xlu0
    %v1179 = vpop.trf.xlu0
    %v1180 = vpop.trf.xlu0
    %v1181 = vpop.trf.xlu0
    %v1182 = vpop.trf.xlu0
    %v1183 = vpop.trf.xlu0
    %v1184 = vpop.trf.xlu0
    %v1185 = vpop.trf.xlu0
    %v1186 = vpop.trf.xlu0
    %v1187 = vpop.trf.xlu0
    %v1188 = vpop.trf.xlu0
    %v1189 = vpop.trf.xlu0
    %v1190 = vpop.trf.xlu0
    %v1191 = vpop.trf.xlu0
    %v1193 = vsel %vm894, %v1176, 0
    %v1196 = vsel %vm894, %v1177, 0
    %1198 = vmatprep.subr.mxu0 0.0
    %1199 = vmatpush1.msra.mxu0 %v769
    %1200 = vmatprep.subr.mxu0 0.0
    %1201 = vmatpush1.msra.mxu0 %v774
    %1202 = vmatprep.subr.mxu0 0.0
    %1203 = vmatpush1.msra.mxu0 0.0
    %1204 = vmatprep.subr.mxu0 0.0
    %1205 = vmatpush1.msra.mxu0 0.0
    %1206 = vmatprep.subr.mxu0 0.0
    %1207 = vmatpush1.msra.mxu0 0.0
    %1208 = vmatprep.subr.mxu0 0.0
    %1209 = vmatpush1.msra.mxu0 0.0
    %1210 = vmatprep.subr.mxu0 0.0
    %1211 = vmatpush1.msra.mxu0 0.0
    %1212 = vmatprep.subr.mxu0 0.0
    %1213 = vmatpush1.msra.mxu0 0.0
    %1214 = vmatprep.subr.mxu0 0.0
    %1215 = vmatpush1.msra.mxu0 0.0
    %1216 = vmatprep.subr.mxu0 0.0
    %1217 = vmatpush1.msra.mxu0 0.0
    %1218 = vmatprep.subr.mxu0 0.0
    %1219 = vmatpush1.msra.mxu0 0.0
    %1220 = vmatprep.subr.mxu0 0.0
    %1221 = vmatpush1.msra.mxu0 0.0
    %1222 = vmatprep.subr.mxu0 0.0
    %1223 = vmatpush1.msra.mxu0 0.0
    %1224 = vmatprep.subr.mxu0 0.0
    %1225 = vmatpush1.msra.mxu0 0.0
    %1226 = vmatprep.subr.mxu0 0.0
    %1227 = vmatpush1.msra.mxu0 0.0
    %1228 = vmatprep.subr.mxu0 0.0
    %1229 = vmatpush1.msra.mxu0 0.0
    %1230 = vmatprep.subr.mxu0 0.0
    %1231 = vmatpush1.msra.mxu0 0.0
    %1232 = vmatprep.subr.mxu0 0.0
    %1233 = vmatpush1.msra.mxu0 0.0
    %1234 = vmatprep.subr.mxu0 0.0
    %1235 = vmatpush1.msra.mxu0 0.0
    %1236 = vmatprep.subr.mxu0 0.0
    %1237 = vmatpush1.msra.mxu0 0.0
    %1238 = vmatprep.subr.mxu0 0.0
    %1239 = vmatpush1.msra.mxu0 0.0
    %1240 = vmatprep.subr.mxu0 0.0
    %1241 = vmatpush1.msra.mxu0 0.0
    %1242 = vmatprep.subr.mxu0 0.0
    %1243 = vmatpush1.msra.mxu0 0.0
    %1244 = vmatprep.subr.mxu0 0.0
    %1245 = vmatpush1.msra.mxu0 0.0
    %1246 = vmatprep.subr.mxu0 0.0
    %1247 = vmatpush1.msra.mxu0 0.0
    %1248 = vmatprep.subr.mxu0 0.0
    %1249 = vmatpush1.msra.mxu0 0.0
    %1250 = vmatprep.subr.mxu0 0.0
    %1251 = vmatpush1.msra.mxu0 0.0
    %1252 = vmatprep.subr.mxu0 0.0
    %1253 = vmatpush1.msra.mxu0 0.0
    %1254 = vmatprep.subr.mxu0 0.0
    %1255 = vmatpush1.msra.mxu0 0.0
    %1256 = vmatprep.subr.mxu0 0.0
    %1257 = vmatpush1.msra.mxu0 0.0
    %1258 = vmatprep.subr.mxu0 0.0
    %1259 = vmatpush1.msra.mxu0 0.0
    %1260 = vmatprep.subr.mxu0 0.0
    %1261 = vmatpush1.msra.mxu0 0.0
    %1262 = vmatprep.mubr.f32.mxu0 0.0
    %1263 = vmatmul.mubr.f32.gmra.mrb[0].mxu0 %v1193
    %v1264 = vpop.f32.mrb[0].mxu0
    %v1265 = vadd.f32 0.0, %v1264
    %v1266 = vpop.f32.mrb[0].mxu0
    %1267 = vmatprep.mubr.f32.mxu0 0.0
    %1268 = vmatmul.mubr.f32.gmra.mrb[0].mxu0 %v1196
    %v1269 = vpop.f32.mrb[0].mxu0
    %v1270 = vadd.f32 0.0, %v1269
    %v1271 = vpop.f32.mrb[0].mxu0
    %1272 = vdwg.mxu0
    %v1273 = vld [vmem:[#allocation5 + $0x90] sm:$0x1]
    %v1274 = vlaneseq
    %v1275 = vshrl.u32 %v1274, 7
    %v1276 = vsub.s32 0, %v1275
    %v1277 = vrot.slane %v1273, %v1276
    %v1278 = vmul.f32 %v1152, %v1277
    %v1279 = vmul.f32 %v1157, %v1277
    %v1280 = vmul.f32 %v1265, %v1277
    %v1281 = vmul.f32 %v1270, %v1277
    %v1282 = vsel %vm55, %v1278, 0.0
    %1283 = vadd.xlane.f32.xlu0 %v1282
    %v1284 = vpop.xlane.xlu0 %1283
    %vm1285 = vcmask 254976
    %v1286 = vsel %vm1285, %v1279, 0.0
    %1287 = vadd.xlane.f32.xlu0 %v1286
    %v1288 = vpop.xlane.xlu0 %1287
    %v1289 = vsel %vm55, %v1280, 0.0
    %1290 = vadd.xlane.f32.xlu0 %v1289
    %v1291 = vpop.xlane.xlu0 %1290
    %v1292 = vsel %vm1285, %v1281, 0.0
    %1293 = vadd.xlane.f32.xlu0 %v1292
    %v1294 = vpop.xlane.xlu0 %1293
    %1296 = vrot.lane.b32.xlu0 %v1273, 96
    %v1297 = vpop.permute.xlu0 %1296
    %s1298 = vtos %v1297
    %v1299 = vstv %s1298
    %v1301 = vadd.f32 %v1284, %v1299
    %v1302 = vadd.f32 %v1288, %v1299
    %v1303 = vadd.f32 %v1291, %v1299
    %v1304 = vadd.f32 %v1294, %v1299
    %v1305 = vxor.u32 %v1301, 2147483648
    %v1306 = vxor.u32 %v1302, 2147483648
    %v1307 = vxor.u32 %v1303, 2147483648
    %v1308 = vxor.u32 %v1304, 2147483648
    %v1309 = vmul.f32 %v1305, 1.442695
    %v1310 = vpow.pop %v1309
    %v1311 = vmul.f32 %v1306, 1.442695
    %v1312 = vpow.pop %v1311
    %v1313 = vmul.f32 %v1307, 1.442695
    %v1314 = vpow.pop %v1313
    %v1315 = vmul.f32 %v1308, 1.442695
    %v1316 = vpow.pop %v1315
    %v1317 = vadd.f32 %v1310, 1.0
    %v1318 = vadd.f32 %v1312, 1.0
    %v1319 = vadd.f32 %v1314, 1.0
    %v1320 = vadd.f32 %v1316, 1.0
    %v1321 = vrcp.pop %v1317
    %v1322 = vmul.f32 1.0, %v1321
    %v1323 = vrcp.pop %v1318
    %v1324 = vmul.f32 1.0, %v1323
    %v1325 = vrcp.pop %v1319
    %v1326 = vmul.f32 1.0, %v1325
    %v1327 = vrcp.pop %v1320
    %v1328 = vmul.f32 1.0, %v1327
    %v1329 = vld [vmem:[#allocation5 + $0x98] sm:$0xff]
    %v1330 = vld [vmem:[#allocation5 + $0xa0] sm:$0x3]
    %v1331 = vld [vmem:[#allocation5 + $0xa8] sm:$0x1]
    %v1332 = vlaneseq
    %v1333 = vshrl.u32 %v1332, 7
    %v1334 = vsub.s32 0, %v1333
    %v1335 = vrot.slane %v1331, %v1334
    %v1340 = vlaneseq
    %v1341 = vand.u32 %v1340, 127
    %v1342 = vlaneseq
    %v1343 = vshrl.u32 %v1342, 7
    %v1344 = vsub.s32 %v1341, %v1343
    %v1345 = vrot.slane %v1322, %v1344
    %v1346 = vadd.s32 %v1341, 4294967288
    %v1347 = vlaneseq
    %v1348 = vshrl.u32 %v1347, 7
    %v1349 = vsub.s32 %v1346, %v1348
    %v1350 = vrot.slane %v1324, %v1349
    %vm1351 = vcmask 130112
    %v1352 = vsel %vm1351, %v1350, %v1345
    %v1353 = vlaneseq
    %v1354 = vshrl.u32 %v1353, 7
    %v1355 = vsub.s32 %v1341, %v1354
    %v1356 = vrot.slane %v1326, %v1355
    %v1357 = vlaneseq
    %v1358 = vshrl.u32 %v1357, 7
    %v1359 = vsub.s32 %v1346, %v1358
    %v1360 = vrot.slane %v1328, %v1359
    %v1361 = vsel %vm1351, %v1360, %v1356
    %vm1362 = vcmask 1041409
    %v1363 = vsel %vm1362, %v1361, %v1352
    %v1364 = vsel %vm992, %v1363, 0
    %vm1366 = vcmask 1041408
    %v1368 = vsel %vm1366, %v1330, 0
    %1370 = vmatprep.subr.mxu0 0.0
    %1371 = vmatpush1.msra.mxu0 %v1329
    %1372 = vmatprep.subr.mxu0 0.0
    %1373 = vmatpush1.msra.mxu0 %v1368
    %1374 = vmatprep.subr.mxu0 0.0
    %1375 = vmatpush1.msra.mxu0 0.0
    %1376 = vmatprep.subr.mxu0 0.0
    %1377 = vmatpush1.msra.mxu0 0.0
    %1378 = vmatprep.subr.mxu0 0.0
    %1379 = vmatpush1.msra.mxu0 0.0
    %1380 = vmatprep.subr.mxu0 0.0
    %1381 = vmatpush1.msra.mxu0 0.0
    %1382 = vmatprep.subr.mxu0 0.0
    %1383 = vmatpush1.msra.mxu0 0.0
    %1384 = vmatprep.subr.mxu0 0.0
    %1385 = vmatpush1.msra.mxu0 0.0
    %1386 = vmatprep.subr.mxu0 0.0
    %1387 = vmatpush1.msra.mxu0 0.0
    %1388 = vmatprep.subr.mxu0 0.0
    %1389 = vmatpush1.msra.mxu0 0.0
    %1390 = vmatprep.subr.mxu0 0.0
    %1391 = vmatpush1.msra.mxu0 0.0
    %1392 = vmatprep.subr.mxu0 0.0
    %1393 = vmatpush1.msra.mxu0 0.0
    %1394 = vmatprep.subr.mxu0 0.0
    %1395 = vmatpush1.msra.mxu0 0.0
    %1396 = vmatprep.subr.mxu0 0.0
    %1397 = vmatpush1.msra.mxu0 0.0
    %1398 = vmatprep.subr.mxu0 0.0
    %1399 = vmatpush1.msra.mxu0 0.0
    %1400 = vmatprep.subr.mxu0 0.0
    %1401 = vmatpush1.msra.mxu0 0.0
    %1402 = vmatprep.subr.mxu0 0.0
    %1403 = vmatpush1.msra.mxu0 0.0
    %1404 = vmatprep.subr.mxu0 0.0
    %1405 = vmatpush1.msra.mxu0 0.0
    %1406 = vmatprep.subr.mxu0 0.0
    %1407 = vmatpush1.msra.mxu0 0.0
    %1408 = vmatprep.subr.mxu0 0.0
    %1409 = vmatpush1.msra.mxu0 0.0
    %1410 = vmatprep.subr.mxu0 0.0
    %1411 = vmatpush1.msra.mxu0 0.0
    %1412 = vmatprep.subr.mxu0 0.0
    %1413 = vmatpush1.msra.mxu0 0.0
    %1414 = vmatprep.subr.mxu0 0.0
    %1415 = vmatpush1.msra.mxu0 0.0
    %1416 = vmatprep.subr.mxu0 0.0
    %1417 = vmatpush1.msra.mxu0 0.0
    %1418 = vmatprep.subr.mxu0 0.0
    %1419 = vmatpush1.msra.mxu0 0.0
    %1420 = vmatprep.subr.mxu0 0.0
    %1421 = vmatpush1.msra.mxu0 0.0
    %1422 = vmatprep.subr.mxu0 0.0
    %1423 = vmatpush1.msra.mxu0 0.0
    %1424 = vmatprep.subr.mxu0 0.0
    %1425 = vmatpush1.msra.mxu0 0.0
    %1426 = vmatprep.subr.mxu0 0.0
    %1427 = vmatpush1.msra.mxu0 0.0
    %1428 = vmatprep.subr.mxu0 0.0
    %1429 = vmatpush1.msra.mxu0 0.0
    %1430 = vmatprep.subr.mxu0 0.0
    %1431 = vmatpush1.msra.mxu0 0.0
    %1432 = vmatprep.subr.mxu0 0.0
    %1433 = vmatpush1.msra.mxu0 0.0
    %1434 = vmatprep.mubr.f32.mxu0 0.0
    %1435 = vmatmul.mubr.f32.gmra.mrb[0].mxu0 %v1364
    %v1436 = vpop.f32.mrb[0].mxu0
    %v1437 = vadd.f32 %v1335, %v1436
    %v1438 = vpop.f32.mrb[0].mxu0
    %1439 = vdwg.mxu0
    %v1440 = vrot.slane %v44, 7
    %v1441 = vsel %vm1362, %v1440, %v43
    %1444 = vrot.lane.b32.xlu0 %v1437, 32
    %v1445 = vpop.permute.xlu0 %1444
    %v1447 = vsel %vm55, %v1441, %v1445
    %v1448 = vld [vmem:[#allocation5 + $0xb0] sm:$0xff]
    %v1449 = vld [vmem:[#allocation5 + $0xb8] sm:$0xff]
    %v1450 = vld [vmem:[#allocation5 + $0xc0] sm:$0xff]
    %v1451 = vld [vmem:[#allocation5 + $0xc8] sm:$0xff]
    %v1452 = vld [vmem:[#allocation5 + $0xd0] sm:$0xff]
    %v1453 = vld [vmem:[#allocation5 + $0xd8] sm:$0xff]
    %v1454 = vld [vmem:[#allocation5 + $0xe0] sm:$0x1]
    %v1455 = vlaneseq
    %v1456 = vshrl.u32 %v1455, 7
    %v1457 = vsub.s32 0, %v1456
    %v1458 = vrot.slane %v1454, %v1457
    %vm1459 = vcmask 392192
    %v1461 = vsel %vm1459, %v1447, 0
    %1463 = vmatprep.subr.mxu0 0.0
    %1464 = vmatpush1.msra.mxu0 %v1448
    %1465 = vmatprep.subr.mxu0 0.0
    %1466 = vmatpush1.msra.mxu0 %v1449
    %1467 = vmatprep.subr.mxu0 0.0
    %1468 = vmatpush1.msra.mxu0 %v1450
    %1469 = vmatprep.subr.mxu0 0.0
    %1470 = vmatpush1.msra.mxu0 %v1451
    %1471 = vmatprep.subr.mxu0 0.0
    %1472 = vmatpush1.msra.mxu0 %v1452
    %1473 = vmatprep.subr.mxu0 0.0
    %1474 = vmatpush1.msra.mxu0 %v1453
    %1475 = vmatprep.subr.mxu0 0.0
    %1476 = vmatpush1.msra.mxu0 0.0
    %1477 = vmatprep.subr.mxu0 0.0
    %1478 = vmatpush1.msra.mxu0 0.0
    %1479 = vmatprep.subr.mxu0 0.0
    %1480 = vmatpush1.msra.mxu0 0.0
    %1481 = vmatprep.subr.mxu0 0.0
    %1482 = vmatpush1.msra.mxu0 0.0
    %1483 = vmatprep.subr.mxu0 0.0
    %1484 = vmatpush1.msra.mxu0 0.0
    %1485 = vmatprep.subr.mxu0 0.0
    %1486 = vmatpush1.msra.mxu0 0.0
    %1487 = vmatprep.subr.mxu0 0.0
    %1488 = vmatpush1.msra.mxu0 0.0
    %1489 = vmatprep.subr.mxu0 0.0
    %1490 = vmatpush1.msra.mxu0 0.0
    %1491 = vmatprep.subr.mxu0 0.0
    %1492 = vmatpush1.msra.mxu0 0.0
    %1493 = vmatprep.subr.mxu0 0.0
    %1494 = vmatpush1.msra.mxu0 0.0
    %1495 = vmatprep.subr.mxu0 0.0
    %1496 = vmatpush1.msra.mxu0 0.0
    %1497 = vmatprep.subr.mxu0 0.0
    %1498 = vmatpush1.msra.mxu0 0.0
    %1499 = vmatprep.subr.mxu0 0.0
    %1500 = vmatpush1.msra.mxu0 0.0
    %1501 = vmatprep.subr.mxu0 0.0
    %1502 = vmatpush1.msra.mxu0 0.0
    %1503 = vmatprep.subr.mxu0 0.0
    %1504 = vmatpush1.msra.mxu0 0.0
    %1505 = vmatprep.subr.mxu0 0.0
    %1506 = vmatpush1.msra.mxu0 0.0
    %1507 = vmatprep.subr.mxu0 0.0
    %1508 = vmatpush1.msra.mxu0 0.0
    %1509 = vmatprep.subr.mxu0 0.0
    %1510 = vmatpush1.msra.mxu0 0.0
    %1511 = vmatprep.subr.mxu0 0.0
    %1512 = vmatpush1.msra.mxu0 0.0
    %1513 = vmatprep.subr.mxu0 0.0
    %1514 = vmatpush1.msra.mxu0 0.0
    %1515 = vmatprep.subr.mxu0 0.0
    %1516 = vmatpush1.msra.mxu0 0.0
    %1517 = vmatprep.subr.mxu0 0.0
    %1518 = vmatpush1.msra.mxu0 0.0
    %1519 = vmatprep.subr.mxu0 0.0
    %1520 = vmatpush1.msra.mxu0 0.0
    %1521 = vmatprep.subr.mxu0 0.0
    %1522 = vmatpush1.msra.mxu0 0.0
    %1523 = vmatprep.subr.mxu0 0.0
    %1524 = vmatpush1.msra.mxu0 0.0
    %1525 = vmatprep.subr.mxu0 0.0
    %1526 = vmatpush1.msra.mxu0 0.0
    %1527 = vmatprep.mubr.f32.mxu0 0.0
    %1528 = vmatmul.mubr.f32.gmra.mrb[0].mxu0 %v1461
    %v1529 = vpop.f32.mrb[0].mxu0
    %v1530 = vadd.f32 %v1458, %v1529
    %v1531 = vpop.f32.mrb[0].mxu0
    %1532 = vdwg.mxu0
    %v1537 = vlaneseq
    %v1538 = vshrl.u32 %v1537, 7
    %v1539 = vsub.s32 %v1341, %v1538
    %v1540 = vrot.slane %v1301, %v1539
    %v1541 = vlaneseq
    %v1542 = vshrl.u32 %v1541, 7
    %v1543 = vsub.s32 %v1346, %v1542
    %v1544 = vrot.slane %v1302, %v1543
    %v1545 = vsel %vm1351, %v1544, %v1540
    %v1546 = vlaneseq
    %v1547 = vshrl.u32 %v1546, 7
    %v1548 = vsub.s32 %v1341, %v1547
    %v1549 = vrot.slane %v1303, %v1548
    %v1550 = vlaneseq
    %v1551 = vshrl.u32 %v1550, 7
    %v1552 = vsub.s32 %v1346, %v1551
    %v1553 = vrot.slane %v1304, %v1552
    %v1554 = vsel %vm1351, %v1553, %v1549
    %v1555 = vsel %vm1362, %v1554, %v1545
    %1558 = vrot.lane.b32.xlu0 %v1530, 10
    %v1559 = vpop.permute.xlu0 %1558
    %v1561 = vsel %vm992, %v1555, %v1559
    %v1562 = vsel %vm894, %v1561, 0.0
    %v1563 = vsel %vm1366, %v1562, 0.0
    %1564 = vst [vmem:[#allocation7] sm:$0xff] %v1563
    // Predicated region
    $region22: #{tpu_custom_call.1} parent=1 // pred_check
      _
    $region23: #{tpu_custom_call.1} parent=1 // pred_check_branch
      %1566 = sbr.rel (0) target = $region25
    $region24: #{tpu_custom_call.1} parent=1 // pred_region
      %s1568 = ssub.s32 128, 128
      %1569 = vsyncadd [#allocation4], %s1568
      %s1571 = sshll.u32 [#allocation7], 4
      %s1572 = int_to_ptr.vmem [resolvable:$true] %s1571
      %1574 = dma.vmem_to_hbm [thread:$0]  %s1572, 128, %s3, [#allocation4]
    $region25: #{tpu_custom_call.1} parent=1 // pred_fallthru
      _
    // Predicated region
    $region26: #{tpu_custom_call.1} parent=1 // pred_check
      _
    $region27: #{tpu_custom_call.1} parent=1 // pred_check_branch
      %1576 = sbr.rel (0) target = $region29
    $region28: #{tpu_custom_call.1} parent=1 // pred_region
      %1577 = dma.done [#allocation4], 128
    $region29: #{tpu_custom_call.1} parent=1 // pred_fallthru
      _
    %1578 = vsyncpa [#allocation3], 1
    %1579 = vsyncpa [#allocation6], 1
    %1580 = vsyncpa [#allocation4], 1

</llo_original>
